<compile_context>
chip_gen: v7x
topology: tpu7x:2x2x1
jax: 0.10.0
libtpu: 0.0.40
codegen_flags: <defaults>
</compile_context>

<pallas_src>
import jax
import jax.numpy as jnp
from jax.experimental import pallas as pl
from jax.experimental.pallas import tpu as pltpu


# -----------------------------------------------------------------------------
# Kernel: one grid step processes a native-layout (Bt, d, L) block.
# Channels live on sublanes, L on lanes; Bt is a small static batch group.
# -----------------------------------------------------------------------------
def _aff2_kernel(
    x_ref, r_ref,
    wl1x_ref, wl1r_ref, bl1_ref, wl2_ref, bl2_ref,      # local_att   (BN folded, split)
    wg1x_ref, wg1r_ref, bg1_ref, wg2_ref, bg2_ref,      # global_att  (BN folded, split)
    wt_ref, bt_ref,                                     # global_temp_att3 (BN folded)
    ww_ref, bw_ref,                                     # weight1 & weight2 stacked
    o_ref,
):
    Bt, d, L = o_ref.shape

    x_all = x_ref[...]                                  # (Bt, d, L)
    r_all = r_ref[...]

    # ---------- global attention branch (batched over the whole block) ----------
    # Per-batch mean over L (single lane reduction), gathered as (d, Bt) columns;
    # the MLP is just two small matmuls for all Bt batch elements at once.
    mx3 = jnp.mean(x_all, axis=2, keepdims=True)        # (Bt, d, 1)
    mr3 = jnp.mean(r_all, axis=2, keepdims=True)
    if Bt == 1:
        mx, mr = mx3[0], mr3[0]                         # (d, 1)
    else:
        mx = jnp.concatenate([mx3[b] for b in range(Bt)], axis=1)   # (d, Bt)
        mr = jnp.concatenate([mr3[b] for b in range(Bt)], axis=1)
    g = jnp.maximum(
        jnp.dot(wg1x_ref[...], mx, preferred_element_type=jnp.float32)
        + jnp.dot(wg1r_ref[...], mr, preferred_element_type=jnp.float32)
        + bg1_ref[...], 0.0)                            # (hp, Bt)
    xg_cols = (jnp.dot(wg2_ref[...], g, preferred_element_type=jnp.float32)
               + bg2_ref[...])                          # (d, Bt)

    # ---------- loop-invariants hoisted (broadcasts are not CSE'd per iteration) -
    wl1x = wl1x_ref[...]                                 # (hp, d)
    wl1r = wl1r_ref[...]                                 # (hp, d)
    wl2 = wl2_ref[...]                                   # (d, hp)
    ww = ww_ref[...]                                     # (2d, d)
    hp = wl1x.shape[0]
    bl1_b = jnp.broadcast_to(bl1_ref[...], (hp, L))
    bl2_b = jnp.broadcast_to(bl2_ref[...], (d, L))
    bt_b = jnp.broadcast_to(bt_ref[...], (d, L))
    bw_b = jnp.broadcast_to(bw_ref[...], (2 * d, L))
    wt = wt_ref[...]                                     # (d, 6) tap columns
    wt_c = [wt[:, t:t + 1] for t in range(6)]            # six (d, 1) columns
    pos = jax.lax.broadcasted_iota(jnp.int32, (1, L), 1)
    keep_l = pos >= 1                                    # y[l-1] exists
    keep_r = pos <= L - 2                                # y[l+1] exists
    inv_2d = 1.0 / (2.0 * d)

    # ---------- per-batch work: every matmul has N = L lanes --------------------
    for b in range(Bt):                                  # Bt is a small static int
        xb = x_all[b]                                    # (d, L)
        rb = r_all[b]

        # local attention: 1x1 conv -> ReLU -> 1x1 conv (x/res halves, no concat)
        h1 = jnp.maximum(
            jnp.dot(wl1x, xb, preferred_element_type=jnp.float32)
            + jnp.dot(wl1r, rb, preferred_element_type=jnp.float32) + bl1_b, 0.0)
        xl_b = jnp.dot(wl2, h1, preferred_element_type=jnp.float32) + bl2_b   # (d, L)

        # temporal branch: channel max / mean (sublane reduce) -> k=3 'same' conv
        # on the VPU as six rank-1 MACs (pltpu.roll lands on the XLU slot).
        ymax = jnp.maximum(jnp.max(xb, axis=0, keepdims=True),
                           jnp.max(rb, axis=0, keepdims=True))                # (1, L)
        yavg = (jnp.sum(xb, axis=0, keepdims=True)
                + jnp.sum(rb, axis=0, keepdims=True)) * inv_2d                # (1, L)
        ymax_m1 = jnp.where(keep_l, pltpu.roll(ymax, 1, 1), 0.0)       # y_max[l-1]
        ymax_p1 = jnp.where(keep_r, pltpu.roll(ymax, L - 1, 1), 0.0)   # y_max[l+1]
        yavg_m1 = jnp.where(keep_l, pltpu.roll(yavg, 1, 1), 0.0)
        yavg_p1 = jnp.where(keep_r, pltpu.roll(yavg, L - 1, 1), 0.0)
        yg3_b = (wt_c[0] * ymax_m1 + wt_c[1] * ymax + wt_c[2] * ymax_p1
                 + wt_c[3] * yavg_m1 + wt_c[4] * yavg + wt_c[5] * yavg_p1 + bt_b)

        # fuse + gates: weight1/weight2 stacked -> ONE (2d, d) matmul + ONE sigmoid
        xlg_b = xl_b + xg_cols[:, b:b + 1] + yg3_b                            # (d, L)
        gates = jax.nn.sigmoid(
            jnp.dot(ww, xlg_b, preferred_element_type=jnp.float32) + bw_b)    # (2d, L)

        o_ref[b] = (xb * gates[:d, :] + rb * gates[d:, :]).astype(o_ref.dtype)


# -----------------------------------------------------------------------------
# Wrapper: native layout, grid over batch groups (no HBM transposes).
# -----------------------------------------------------------------------------
def _pick_block_batch(B, d, L):
    """Largest divisor of B that (a) keeps grid >= 2 when B >= 2 so the 'parallel'
    batch-group axis can shard across v7x's two TensorCores, and (b) keeps the
    per-block f32 working set (double-buffered x/res/out plus live temporaries)
    comfortably inside v7x's 32 MiB scoped-VMEM default."""
    if B <= 1:
        return 1
    vmem_budget = 12 * 1024 * 1024
    per_batch_bytes = 24 * 2 * d * L * 4           # generous live-f32 estimate / batch elem
    max_bt = max(1, vmem_budget // max(per_batch_bytes, 1))
    target = max(1, min(B // 2, max_bt))
    bt = 1
    for cand in range(1, target + 1):
        if B % cand == 0:
            bt = cand
    return bt


def my_aff2_pallas(x, residual, kparams, *, block_batch=None):
    """x, residual: (B, d, L) float32, native NCL layout."""
    B, d, L = x.shape
    assert residual.shape == x.shape
    assert L % 128 == 0, "keep L a multiple of 128 for lane-dense tiles/stores"
    # NOTE: d should ideally be a multiple of 8 (sublane alignment of gates[:d]/[d:]).
    Bt = _pick_block_batch(B, d, L) if block_batch is None else block_batch
    assert B % Bt == 0, "block_batch must divide the batch"

    kparams = tuple(kparams)

    def const_spec(arr):
        nd = arr.ndim
        return pl.BlockSpec(arr.shape, lambda i, nd=nd: (0,) * nd)

    data_spec = pl.BlockSpec((Bt, d, L), lambda i: (i, 0, 0))

    return pl.pallas_call(
        _aff2_kernel,
        out_shape=jax.ShapeDtypeStruct((B, d, L), x.dtype),
        grid_spec=pltpu.PrefetchScalarGridSpec(
            num_scalar_prefetch=0,
            grid=(B // Bt,),
            in_specs=[data_spec, data_spec] + [const_spec(p) for p in kparams],
            out_specs=data_spec,
        ),
        # Parallel batch-group axis: v7x's two TensorCores split it; no-op on v5e/v6e.
        compiler_params=pltpu.CompilerParams(dimension_semantics=("parallel",)),
    )(x, residual, *kparams)


# -----------------------------------------------------------------------------
# Raw (PyTorch-layout) parameters with non-trivial eval-mode BN running stats.
# -----------------------------------------------------------------------------
def init_raw_params(key, dim, r=4):
    h = dim * 2 // r
    ks = iter(jax.random.split(key, 40))

    def u(shape, fan_in):
        bound = 1.0 / (fan_in ** 0.5)
        return jax.random.uniform(next(ks), shape, jnp.float32, -bound, bound)

    def bn(c):  # (gamma, beta, running_mean, running_var) -- non-trivial on purpose
        gamma = 1.0 + 0.1 * jax.random.normal(next(ks), (c,), jnp.float32)
        beta = 0.1 * jax.random.normal(next(ks), (c,), jnp.float32)
        mean = 0.1 * jax.random.normal(next(ks), (c,), jnp.float32)
        var = jnp.abs(1.0 + 0.1 * jax.random.normal(next(ks), (c,), jnp.float32))
        return (gamma, beta, mean, var)

    return dict(
        la_w1=u((h, 2 * dim), 2 * dim), la_b1=u((h,), 2 * dim), la_bn1=bn(h),
        la_w2=u((dim, h), h), la_b2=u((dim,), h), la_bn2=bn(dim),
        ga_w1=u((h, 2 * dim), 2 * dim), ga_b1=u((h,), 2 * dim), ga_bn1=bn(h),
        ga_w2=u((dim, h), h), ga_b2=u((dim,), h), ga_bn2=bn(dim),
        gt3_w=u((dim, 2, 3), 2 * 3), gt3_b=u((dim,), 2 * 3), gt3_bn=bn(dim),
        w1_w=u((dim, dim), dim), w1_b=u((dim,), dim),
        w2_w=u((dim, dim), dim), w2_b=u((dim,), dim),
    )


# -----------------------------------------------------------------------------
# Fold eval-mode BN, split / pad / stack the weights into the kernel layout.
# -----------------------------------------------------------------------------
def pack_kernel_params(raw, dim, eps=1e-5):
    d = dim

    def fold(w, b, bnp):
        gamma, beta, mean, var = bnp
        s = gamma / jnp.sqrt(var + eps)
        w_f = w * (s[:, None] if w.ndim == 2 else s[:, None, None])
        b_f = (b - mean) * s + beta
        return w_f, b_f

    wl1, bl1 = fold(raw['la_w1'], raw['la_b1'], raw['la_bn1'])     # (h, 2d), (h,)
    wl2, bl2 = fold(raw['la_w2'], raw['la_b2'], raw['la_bn2'])     # (d, h),  (d,)
    wg1, bg1 = fold(raw['ga_w1'], raw['ga_b1'], raw['ga_bn1'])
    wg2, bg2 = fold(raw['ga_w2'], raw['ga_b2'], raw['ga_bn2'])
    wt3, bt = fold(raw['gt3_w'], raw['gt3_b'], raw['gt3_bn'])      # (d, 2, 3), (d,)

    h = wl1.shape[0]
    hp = ((h + 7) // 8) * 8                 # hidden dim padded to a sublane multiple
    ph = hp - h

    # local_att: first conv split into x / residual halves, zero-padded hidden dim
    # (exact: ReLU(0)=0 and the padded wl2 columns are zero).
    wl1x = jnp.pad(wl1[:, :d], ((0, ph), (0, 0)))                  # (hp, d)
    wl1r = jnp.pad(wl1[:, d:], ((0, ph), (0, 0)))
    bl1p = jnp.pad(bl1, (0, ph))[:, None]                          # (hp, 1)
    wl2p = jnp.pad(wl2, ((0, 0), (0, ph)))                         # (d, hp)
    bl2c = bl2[:, None]                                            # (d, 1)

    # global_att: same split / padding, same (out, in) orientation as local_att.
    wg1x = jnp.pad(wg1[:, :d], ((0, ph), (0, 0)))
    wg1r = jnp.pad(wg1[:, d:], ((0, ph), (0, 0)))
    bg1p = jnp.pad(bg1, (0, ph))[:, None]
    wg2p = jnp.pad(wg2, ((0, 0), (0, ph)))
    bg2c = bg2[:, None]

    # global_temp_att3: (d, 2, 3) -> (d, 6) tap columns ordered
    # [max@l-1, max@l, max@l+1, avg@l-1, avg@l, avg@l+1] (row-major reshape).
    wt6 = wt3.reshape(d, 6)
    btc = bt[:, None]

    # weight1 / weight2 gate convs (no BN) stacked -> ONE (2d, d) matmul.
    ww = jnp.concatenate([raw['w1_w'], raw['w2_w']], axis=0)       # (2d, d)
    bw = jnp.concatenate([raw['w1_b'], raw['w2_b']], axis=0)[:, None]

    params = (wl1x, wl1r, bl1p, wl2p, bl2c,
              wg1x, wg1r, bg1p, wg2p, bg2c,
              wt6, btc, ww, bw)
    return tuple(jnp.asarray(p, jnp.float32) for p in params)


# -----------------------------------------------------------------------------
# Pure-JAX reference consuming the RAW PyTorch-layout params (BN applied unfolded),
# mirroring myAFF2.forward exactly -- catches folding / split / tap-order bugs.
# -----------------------------------------------------------------------------
def my_aff2_ref(x, res, raw, eps=1e-5):
    hi = jax.lax.Precision.HIGHEST

    def conv1x1(w, b, z):                      # w (Co, Ci), b (Co,), z (B, Ci, L)
        return jnp.einsum('oc,bcl->bol', w, z, precision=hi) + b[None, :, None]

    def bn(z, p):                              # eval-mode BatchNorm1d
        gamma, beta, mean, var = p
        return ((z - mean[None, :, None]) / jnp.sqrt(var[None, :, None] + eps)
                * gamma[None, :, None] + beta[None, :, None])

    xa = jnp.concatenate([x, res], axis=1)                                   # (B, 2d, L)
    xl = bn(conv1x1(raw['la_w2'], raw['la_b2'],
                    jax.nn.relu(bn(conv1x1(raw['la_w1'], raw['la_b1'], xa),
                                   raw['la_bn1']))),
            raw['la_bn2'])
    xp = jnp.mean(xa, axis=2, keepdims=True)                                 # (B, 2d, 1)
    xg = bn(conv1x1(raw['ga_w2'], raw['ga_b2'],
                    jax.nn.relu(bn(conv1x1(raw['ga_w1'], raw['ga_b1'], xp),
                                   raw['ga_bn1']))),
            raw['ga_bn2'])                                                   # (B, d, 1)
    y = jnp.concatenate([jnp.max(xa, axis=1, keepdims=True),
                         jnp.mean(xa, axis=1, keepdims=True)], axis=1)       # (B, 2, L)
    L = y.shape[-1]
    yp = jnp.pad(y, ((0, 0), (0, 0), (1, 1)))
    w3 = raw['gt3_w']                                                        # (d, 2, 3)
    yg3 = sum(jnp.einsum('oc,bcl->bol', w3[:, :, t], yp[:, :, t:t + L], precision=hi)
              for t in range(3))
    yg3 = bn(yg3 + raw['gt3_b'][None, :, None], raw['gt3_bn'])
    xlg = xl + xg + yg3
    w1 = jax.nn.sigmoid(conv1x1(raw['w1_w'], raw['w1_b'], xlg))
    w2 = jax.nn.sigmoid(conv1x1(raw['w2_w'], raw['w2_b'], xlg))
    return x * w1 + res * w2


if __name__ == "__main__":
    B, dim, L = 4, 8, 128          # (batch, channels, sequence length); h = 2*dim/4 = 4
    key = jax.random.PRNGKey(0)
    kx, kr, kp = jax.random.split(key, 3)
    x = jax.random.normal(kx, (B, dim, L), jnp.float32)
    residual = jax.random.normal(kr, (B, dim, L), jnp.float32)

    raw = init_raw_params(kp, dim, r=4)
    kparams = pack_kernel_params(raw, dim)

    # Default block_batch -> Bt=2: grid=(2,) stays a parallel axis for v7x's two TCs.
    out = jax.block_until_ready(my_aff2_pallas(x, residual, kparams))

    ref = my_aff2_ref(x, residual, raw)
    assert out.shape == (B, dim, L)
    max_err = float(jnp.max(jnp.abs(out - ref)))
    assert jnp.allclose(out, ref, rtol=1e-3, atol=1e-3), f"max abs err {max_err}"
    print("KERNEL_OK")
</pallas_src>

<mosaic_0001>
module attributes {stable_mosaic.version = 11 : i64} {
  func.func @_aff2_kernel(%arg0: i32, %arg1: memref<2x8x128xf32, #tpu.memory_space<vmem>>, %arg2: memref<2x8x128xf32, #tpu.memory_space<vmem>>, %arg3: memref<8x8xf32, #tpu.memory_space<vmem>>, %arg4: memref<8x8xf32, #tpu.memory_space<vmem>>, %arg5: memref<8x1xf32, #tpu.memory_space<vmem>>, %arg6: memref<8x8xf32, #tpu.memory_space<vmem>>, %arg7: memref<8x1xf32, #tpu.memory_space<vmem>>, %arg8: memref<8x8xf32, #tpu.memory_space<vmem>>, %arg9: memref<8x8xf32, #tpu.memory_space<vmem>>, %arg10: memref<8x1xf32, #tpu.memory_space<vmem>>, %arg11: memref<8x8xf32, #tpu.memory_space<vmem>>, %arg12: memref<8x1xf32, #tpu.memory_space<vmem>>, %arg13: memref<8x6xf32, #tpu.memory_space<vmem>>, %arg14: memref<8x1xf32, #tpu.memory_space<vmem>>, %arg15: memref<16x8xf32, #tpu.memory_space<vmem>>, %arg16: memref<16x1xf32, #tpu.memory_space<vmem>>, %arg17: memref<2x8x128xf32, #tpu.memory_space<vmem>>) attributes {dimension_semantics = [#tpu.dimension_semantics<parallel>], iteration_bounds = array<i64: 2>, scalar_prefetch = 0 : i64, scratch_operands = 0 : i64, tpu.core_type = #tpu.core_type<tc>, window_params = [{transform_indices = @transform_0, window_bounds = array<i64: 2, 8, 128>}, {transform_indices = @transform_1, window_bounds = array<i64: 2, 8, 128>}, {pipeline_mode = #tpu.pipeline_mode<synchronous>, transform_indices = @transform_2, window_bounds = array<i64: 8, 8>}, {pipeline_mode = #tpu.pipeline_mode<synchronous>, transform_indices = @transform_3, window_bounds = array<i64: 8, 8>}, {pipeline_mode = #tpu.pipeline_mode<synchronous>, transform_indices = @transform_4, window_bounds = array<i64: 8, 1>}, {pipeline_mode = #tpu.pipeline_mode<synchronous>, transform_indices = @transform_5, window_bounds = array<i64: 8, 8>}, {pipeline_mode = #tpu.pipeline_mode<synchronous>, transform_indices = @transform_6, window_bounds = array<i64: 8, 1>}, {pipeline_mode = #tpu.pipeline_mode<synchronous>, transform_indices = @transform_7, window_bounds = array<i64: 8, 8>}, {pipeline_mode = #tpu.pipeline_mode<synchronous>, transform_indices = @transform_8, window_bounds = array<i64: 8, 8>}, {pipeline_mode = #tpu.pipeline_mode<synchronous>, transform_indices = @transform_9, window_bounds = array<i64: 8, 1>}, {pipeline_mode = #tpu.pipeline_mode<synchronous>, transform_indices = @transform_10, window_bounds = array<i64: 8, 8>}, {pipeline_mode = #tpu.pipeline_mode<synchronous>, transform_indices = @transform_11, window_bounds = array<i64: 8, 1>}, {pipeline_mode = #tpu.pipeline_mode<synchronous>, transform_indices = @transform_12, window_bounds = array<i64: 8, 6>}, {pipeline_mode = #tpu.pipeline_mode<synchronous>, transform_indices = @transform_13, window_bounds = array<i64: 8, 1>}, {pipeline_mode = #tpu.pipeline_mode<synchronous>, transform_indices = @transform_14, window_bounds = array<i64: 16, 8>}, {pipeline_mode = #tpu.pipeline_mode<synchronous>, transform_indices = @transform_15, window_bounds = array<i64: 16, 1>}, {transform_indices = @transform_16, window_bounds = array<i64: 2, 8, 128>}]} {
    %c0 = arith.constant 0 : index
    %c0_0 = arith.constant 0 : index
    %c0_1 = arith.constant 0 : index
    %0 = vector.load %arg1[%c0, %c0_0, %c0_1] : memref<2x8x128xf32, #tpu.memory_space<vmem>>, vector<2x8x128xf32>
    %c0_2 = arith.constant 0 : index
    %c0_3 = arith.constant 0 : index
    %c0_4 = arith.constant 0 : index
    %1 = vector.load %arg2[%c0_2, %c0_3, %c0_4] : memref<2x8x128xf32, #tpu.memory_space<vmem>>, vector<2x8x128xf32>
    %cst = arith.constant dense<0.000000e+00> : vector<2x8xf32>
    %2 = vector.multi_reduction <add>, %0, %cst [2] : vector<2x8x128xf32> to vector<2x8xf32>
    %3 = vector.shape_cast %2 : vector<2x8xf32> to vector<2x8x1xf32>
    %cst_5 = arith.constant 1.280000e+02 : f32
    %4 = vector.broadcast %cst_5 : f32 to vector<2x8x1xf32>
    %5 = arith.divf %3, %4 : vector<2x8x1xf32>
    %cst_6 = arith.constant dense<0.000000e+00> : vector<2x8xf32>
    %6 = vector.multi_reduction <add>, %1, %cst_6 [2] : vector<2x8x128xf32> to vector<2x8xf32>
    %7 = vector.shape_cast %6 : vector<2x8xf32> to vector<2x8x1xf32>
    %cst_7 = arith.constant 1.280000e+02 : f32
    %8 = vector.broadcast %cst_7 : f32 to vector<2x8x1xf32>
    %9 = arith.divf %7, %8 : vector<2x8x1xf32>
    %10 = vector.extract_strided_slice %5 {offsets = [0, 0, 0], sizes = [1, 8, 1], strides = [1, 1, 1]} : vector<2x8x1xf32> to vector<1x8x1xf32>
    %11 = vector.shape_cast %10 : vector<1x8x1xf32> to vector<8x1xf32>
    %12 = vector.extract_strided_slice %5 {offsets = [1, 0, 0], sizes = [1, 8, 1], strides = [1, 1, 1]} : vector<2x8x1xf32> to vector<1x8x1xf32>
    %13 = vector.shape_cast %12 : vector<1x8x1xf32> to vector<8x1xf32>
    %14 = tpu.concatenate %11, %13 in 1 : vector<8x1xf32>, vector<8x1xf32> -> vector<8x2xf32>
    %15 = vector.extract_strided_slice %9 {offsets = [0, 0, 0], sizes = [1, 8, 1], strides = [1, 1, 1]} : vector<2x8x1xf32> to vector<1x8x1xf32>
    %16 = vector.shape_cast %15 : vector<1x8x1xf32> to vector<8x1xf32>
    %17 = vector.extract_strided_slice %9 {offsets = [1, 0, 0], sizes = [1, 8, 1], strides = [1, 1, 1]} : vector<2x8x1xf32> to vector<1x8x1xf32>
    %18 = vector.shape_cast %17 : vector<1x8x1xf32> to vector<8x1xf32>
    %19 = tpu.concatenate %16, %18 in 1 : vector<8x1xf32>, vector<8x1xf32> -> vector<8x2xf32>
    %c0_8 = arith.constant 0 : index
    %c0_9 = arith.constant 0 : index
    %20 = vector.load %arg8[%c0_8, %c0_9] : memref<8x8xf32, #tpu.memory_space<vmem>>, vector<8x8xf32>
    %cst_10 = arith.constant dense<0.000000e+00> : vector<8x2xf32>
    %21 = tpu.matmul %20, %14, %cst_10 {dimension_numbers = #tpu.dot_dimension_numbers<[1], [0], [0], [1], [0, 0, 1, 1], [], []>} : vector<8x8xf32>, vector<8x2xf32>, vector<8x2xf32> -> vector<8x2xf32>
    %c0_11 = arith.constant 0 : index
    %c0_12 = arith.constant 0 : index
    %22 = vector.load %arg9[%c0_11, %c0_12] : memref<8x8xf32, #tpu.memory_space<vmem>>, vector<8x8xf32>
    %cst_13 = arith.constant dense<0.000000e+00> : vector<8x2xf32>
    %23 = tpu.matmul %22, %19, %cst_13 {dimension_numbers = #tpu.dot_dimension_numbers<[1], [0], [0], [1], [0, 0, 1, 1], [], []>} : vector<8x8xf32>, vector<8x2xf32>, vector<8x2xf32> -> vector<8x2xf32>
    %24 = arith.addf %21, %23 : vector<8x2xf32>
    %c0_14 = arith.constant 0 : index
    %c0_15 = arith.constant 0 : index
    %25 = vector.load %arg10[%c0_14, %c0_15] : memref<8x1xf32, #tpu.memory_space<vmem>>, vector<8x1xf32>
    %26 = vector.broadcast %25 : vector<8x1xf32> to vector<8x2xf32>
    %27 = arith.addf %24, %26 : vector<8x2xf32>
    %cst_16 = arith.constant 0.000000e+00 : f32
    %28 = vector.broadcast %cst_16 : f32 to vector<8x2xf32>
    %29 = arith.maximumf %27, %28 : vector<8x2xf32>
    %c0_17 = arith.constant 0 : index
    %c0_18 = arith.constant 0 : index
    %30 = vector.load %arg11[%c0_17, %c0_18] : memref<8x8xf32, #tpu.memory_space<vmem>>, vector<8x8xf32>
    %cst_19 = arith.constant dense<0.000000e+00> : vector<8x2xf32>
    %31 = tpu.matmul %30, %29, %cst_19 {dimension_numbers = #tpu.dot_dimension_numbers<[1], [0], [0], [1], [0, 0, 1, 1], [], []>} : vector<8x8xf32>, vector<8x2xf32>, vector<8x2xf32> -> vector<8x2xf32>
    %c0_20 = arith.constant 0 : index
    %c0_21 = arith.constant 0 : index
    %32 = vector.load %arg12[%c0_20, %c0_21] : memref<8x1xf32, #tpu.memory_space<vmem>>, vector<8x1xf32>
    %33 = vector.broadcast %32 : vector<8x1xf32> to vector<8x2xf32>
    %34 = arith.addf %31, %33 : vector<8x2xf32>
    %c0_22 = arith.constant 0 : index
    %c0_23 = arith.constant 0 : index
    %35 = vector.load %arg3[%c0_22, %c0_23] : memref<8x8xf32, #tpu.memory_space<vmem>>, vector<8x8xf32>
    %c0_24 = arith.constant 0 : index
    %c0_25 = arith.constant 0 : index
    %36 = vector.load %arg4[%c0_24, %c0_25] : memref<8x8xf32, #tpu.memory_space<vmem>>, vector<8x8xf32>
    %c0_26 = arith.constant 0 : index
    %c0_27 = arith.constant 0 : index
    %37 = vector.load %arg6[%c0_26, %c0_27] : memref<8x8xf32, #tpu.memory_space<vmem>>, vector<8x8xf32>
    %c0_28 = arith.constant 0 : index
    %c0_29 = arith.constant 0 : index
    %38 = vector.load %arg15[%c0_28, %c0_29] : memref<16x8xf32, #tpu.memory_space<vmem>>, vector<16x8xf32>
    %c0_30 = arith.constant 0 : index
    %c0_31 = arith.constant 0 : index
    %39 = vector.load %arg5[%c0_30, %c0_31] : memref<8x1xf32, #tpu.memory_space<vmem>>, vector<8x1xf32>
    %40 = vector.shape_cast %39 : vector<8x1xf32> to vector<8x1xf32>
    %41 = vector.broadcast %40 : vector<8x1xf32> to vector<8x128xf32>
    %c0_32 = arith.constant 0 : index
    %c0_33 = arith.constant 0 : index
    %42 = vector.load %arg7[%c0_32, %c0_33] : memref<8x1xf32, #tpu.memory_space<vmem>>, vector<8x1xf32>
    %43 = vector.shape_cast %42 : vector<8x1xf32> to vector<8x1xf32>
    %44 = vector.broadcast %43 : vector<8x1xf32> to vector<8x128xf32>
    %c0_34 = arith.constant 0 : index
    %c0_35 = arith.constant 0 : index
    %45 = vector.load %arg14[%c0_34, %c0_35] : memref<8x1xf32, #tpu.memory_space<vmem>>, vector<8x1xf32>
    %46 = vector.shape_cast %45 : vector<8x1xf32> to vector<8x1xf32>
    %47 = vector.broadcast %46 : vector<8x1xf32> to vector<8x128xf32>
    %c0_36 = arith.constant 0 : index
    %c0_37 = arith.constant 0 : index
    %48 = vector.load %arg16[%c0_36, %c0_37] : memref<16x1xf32, #tpu.memory_space<vmem>>, vector<16x1xf32>
    %49 = vector.shape_cast %48 : vector<16x1xf32> to vector<16x1xf32>
    %50 = vector.broadcast %49 : vector<16x1xf32> to vector<16x128xf32>
    %c0_38 = arith.constant 0 : index
    %c0_39 = arith.constant 0 : index
    %51 = vector.load %arg13[%c0_38, %c0_39] : memref<8x6xf32, #tpu.memory_space<vmem>>, vector<8x6xf32>
    %52 = vector.extract_strided_slice %51 {offsets = [0, 0], sizes = [8, 1], strides = [1, 1]} : vector<8x6xf32> to vector<8x1xf32>
    %53 = vector.extract_strided_slice %51 {offsets = [0, 1], sizes = [8, 1], strides = [1, 1]} : vector<8x6xf32> to vector<8x1xf32>
    %54 = vector.extract_strided_slice %51 {offsets = [0, 2], sizes = [8, 1], strides = [1, 1]} : vector<8x6xf32> to vector<8x1xf32>
    %55 = vector.extract_strided_slice %51 {offsets = [0, 3], sizes = [8, 1], strides = [1, 1]} : vector<8x6xf32> to vector<8x1xf32>
    %56 = vector.extract_strided_slice %51 {offsets = [0, 4], sizes = [8, 1], strides = [1, 1]} : vector<8x6xf32> to vector<8x1xf32>
    %57 = vector.extract_strided_slice %51 {offsets = [0, 5], sizes = [8, 1], strides = [1, 1]} : vector<8x6xf32> to vector<8x1xf32>
    %58 = tpu.iota {dimensions = array<i32: 1>} : vector<1x128xi32>
    %c1_i32 = arith.constant 1 : i32
    %59 = vector.broadcast %c1_i32 : i32 to vector<1x128xi32>
    %60 = arith.cmpi sge, %58, %59 : vector<1x128xi32>
    %c126_i32 = arith.constant 126 : i32
    %61 = vector.broadcast %c126_i32 : i32 to vector<1x128xi32>
    %62 = arith.cmpi sle, %58, %61 : vector<1x128xi32>
    %63 = vector.extract_strided_slice %0 {offsets = [0, 0, 0], sizes = [1, 8, 128], strides = [1, 1, 1]} : vector<2x8x128xf32> to vector<1x8x128xf32>
    %64 = vector.shape_cast %63 : vector<1x8x128xf32> to vector<8x128xf32>
    %65 = vector.extract_strided_slice %1 {offsets = [0, 0, 0], sizes = [1, 8, 128], strides = [1, 1, 1]} : vector<2x8x128xf32> to vector<1x8x128xf32>
    %66 = vector.shape_cast %65 : vector<1x8x128xf32> to vector<8x128xf32>
    %cst_40 = arith.constant dense<0.000000e+00> : vector<8x128xf32>
    %67 = tpu.matmul %35, %64, %cst_40 {dimension_numbers = #tpu.dot_dimension_numbers<[1], [0], [0], [1], [0, 0, 1, 1], [], []>} : vector<8x8xf32>, vector<8x128xf32>, vector<8x128xf32> -> vector<8x128xf32>
    %cst_41 = arith.constant dense<0.000000e+00> : vector<8x128xf32>
    %68 = tpu.matmul %36, %66, %cst_41 {dimension_numbers = #tpu.dot_dimension_numbers<[1], [0], [0], [1], [0, 0, 1, 1], [], []>} : vector<8x8xf32>, vector<8x128xf32>, vector<8x128xf32> -> vector<8x128xf32>
    %69 = arith.addf %67, %68 : vector<8x128xf32>
    %70 = arith.addf %69, %41 : vector<8x128xf32>
    %cst_42 = arith.constant 0.000000e+00 : f32
    %71 = vector.broadcast %cst_42 : f32 to vector<8x128xf32>
    %72 = arith.maximumf %70, %71 : vector<8x128xf32>
    %cst_43 = arith.constant dense<0.000000e+00> : vector<8x128xf32>
    %73 = tpu.matmul %37, %72, %cst_43 {dimension_numbers = #tpu.dot_dimension_numbers<[1], [0], [0], [1], [0, 0, 1, 1], [], []>} : vector<8x8xf32>, vector<8x128xf32>, vector<8x128xf32> -> vector<8x128xf32>
    %74 = arith.addf %73, %44 : vector<8x128xf32>
    %cst_44 = arith.constant dense<0xFF800000> : vector<128xf32>
    %75 = vector.multi_reduction <maximumf>, %64, %cst_44 [0] : vector<8x128xf32> to vector<128xf32>
    %76 = vector.shape_cast %75 : vector<128xf32> to vector<1x128xf32>
    %cst_45 = arith.constant dense<0xFF800000> : vector<128xf32>
    %77 = vector.multi_reduction <maximumf>, %66, %cst_45 [0] : vector<8x128xf32> to vector<128xf32>
    %78 = vector.shape_cast %77 : vector<128xf32> to vector<1x128xf32>
    %79 = arith.maximumf %76, %78 : vector<1x128xf32>
    %cst_46 = arith.constant dense<0.000000e+00> : vector<128xf32>
    %80 = vector.multi_reduction <add>, %64, %cst_46 [0] : vector<8x128xf32> to vector<128xf32>
    %81 = vector.shape_cast %80 : vector<128xf32> to vector<1x128xf32>
    %cst_47 = arith.constant dense<0.000000e+00> : vector<128xf32>
    %82 = vector.multi_reduction <add>, %66, %cst_47 [0] : vector<8x128xf32> to vector<128xf32>
    %83 = vector.shape_cast %82 : vector<128xf32> to vector<1x128xf32>
    %84 = arith.addf %81, %83 : vector<1x128xf32>
    %cst_48 = arith.constant 6.250000e-02 : f32
    %85 = vector.broadcast %cst_48 : f32 to vector<1x128xf32>
    %86 = arith.mulf %84, %85 : vector<1x128xf32>
    %c1_i32_49 = arith.constant 1 : i32
    %87 = tpu.dynamic_rotate %79 by %c1_i32_49 dim 1 : vector<1x128xf32>, i32 -> vector<1x128xf32>
    %cst_50 = arith.constant 0.000000e+00 : f32
    %88 = vector.broadcast %cst_50 : f32 to vector<1x128xf32>
    %89 = arith.select %60, %87, %88 : vector<1x128xi1>, vector<1x128xf32>
    %c127_i32 = arith.constant 127 : i32
    %90 = tpu.dynamic_rotate %79 by %c127_i32 dim 1 : vector<1x128xf32>, i32 -> vector<1x128xf32>
    %cst_51 = arith.constant 0.000000e+00 : f32
    %91 = vector.broadcast %cst_51 : f32 to vector<1x128xf32>
    %92 = arith.select %62, %90, %91 : vector<1x128xi1>, vector<1x128xf32>
    %c1_i32_52 = arith.constant 1 : i32
    %93 = tpu.dynamic_rotate %86 by %c1_i32_52 dim 1 : vector<1x128xf32>, i32 -> vector<1x128xf32>
    %cst_53 = arith.constant 0.000000e+00 : f32
    %94 = vector.broadcast %cst_53 : f32 to vector<1x128xf32>
    %95 = arith.select %60, %93, %94 : vector<1x128xi1>, vector<1x128xf32>
    %c127_i32_54 = arith.constant 127 : i32
    %96 = tpu.dynamic_rotate %86 by %c127_i32_54 dim 1 : vector<1x128xf32>, i32 -> vector<1x128xf32>
    %cst_55 = arith.constant 0.000000e+00 : f32
    %97 = vector.broadcast %cst_55 : f32 to vector<1x128xf32>
    %98 = arith.select %62, %96, %97 : vector<1x128xi1>, vector<1x128xf32>
    %99 = vector.broadcast %52 : vector<8x1xf32> to vector<8x128xf32>
    %100 = vector.broadcast %89 : vector<1x128xf32> to vector<8x128xf32>
    %101 = arith.mulf %99, %100 : vector<8x128xf32>
    %102 = vector.broadcast %53 : vector<8x1xf32> to vector<8x128xf32>
    %103 = vector.broadcast %79 : vector<1x128xf32> to vector<8x128xf32>
    %104 = arith.mulf %102, %103 : vector<8x128xf32>
    %105 = arith.addf %101, %104 : vector<8x128xf32>
    %106 = vector.broadcast %54 : vector<8x1xf32> to vector<8x128xf32>
    %107 = vector.broadcast %92 : vector<1x128xf32> to vector<8x128xf32>
    %108 = arith.mulf %106, %107 : vector<8x128xf32>
    %109 = arith.addf %105, %108 : vector<8x128xf32>
    %110 = vector.broadcast %55 : vector<8x1xf32> to vector<8x128xf32>
    %111 = vector.broadcast %95 : vector<1x128xf32> to vector<8x128xf32>
    %112 = arith.mulf %110, %111 : vector<8x128xf32>
    %113 = arith.addf %109, %112 : vector<8x128xf32>
    %114 = vector.broadcast %56 : vector<8x1xf32> to vector<8x128xf32>
    %115 = vector.broadcast %86 : vector<1x128xf32> to vector<8x128xf32>
    %116 = arith.mulf %114, %115 : vector<8x128xf32>
    %117 = arith.addf %113, %116 : vector<8x128xf32>
    %118 = vector.broadcast %57 : vector<8x1xf32> to vector<8x128xf32>
    %119 = vector.broadcast %98 : vector<1x128xf32> to vector<8x128xf32>
    %120 = arith.mulf %118, %119 : vector<8x128xf32>
    %121 = arith.addf %117, %120 : vector<8x128xf32>
    %122 = arith.addf %121, %47 : vector<8x128xf32>
    %123 = vector.extract_strided_slice %34 {offsets = [0, 0], sizes = [8, 1], strides = [1, 1]} : vector<8x2xf32> to vector<8x1xf32>
    %124 = vector.broadcast %123 : vector<8x1xf32> to vector<8x128xf32>
    %125 = arith.addf %74, %124 : vector<8x128xf32>
    %126 = arith.addf %125, %122 : vector<8x128xf32>
    %cst_56 = arith.constant dense<0.000000e+00> : vector<16x128xf32>
    %127 = tpu.matmul %38, %126, %cst_56 {dimension_numbers = #tpu.dot_dimension_numbers<[1], [0], [0], [1], [0, 0, 1, 1], [], []>} : vector<16x8xf32>, vector<8x128xf32>, vector<16x128xf32> -> vector<16x128xf32>
    %128 = arith.addf %127, %50 : vector<16x128xf32>
    %129 = arith.negf %128 : vector<16x128xf32>
    %130 = math.exp %129 : vector<16x128xf32>
    %cst_57 = arith.constant 1.000000e+00 : f32
    %131 = vector.broadcast %cst_57 : f32 to vector<16x128xf32>
    %132 = arith.addf %131, %130 : vector<16x128xf32>
    %133 = arith.divf %131, %132 : vector<16x128xf32>
    %134 = vector.extract_strided_slice %133 {offsets = [0, 0], sizes = [8, 128], strides = [1, 1]} : vector<16x128xf32> to vector<8x128xf32>
    %135 = arith.mulf %64, %134 : vector<8x128xf32>
    %136 = vector.extract_strided_slice %133 {offsets = [8, 0], sizes = [8, 128], strides = [1, 1]} : vector<16x128xf32> to vector<8x128xf32>
    %137 = arith.mulf %66, %136 : vector<8x128xf32>
    %138 = arith.addf %135, %137 : vector<8x128xf32>
    %c0_58 = arith.constant 0 : index
    %c0_59 = arith.constant 0 : index
    %c0_60 = arith.constant 0 : index
    %139 = vector.load %arg17[%c0_58, %c0_59, %c0_60] : memref<2x8x128xf32, #tpu.memory_space<vmem>>, vector<1x8x128xf32>
    %140 = vector.shape_cast %139 : vector<1x8x128xf32> to vector<8x128xf32>
    %141 = vector.shape_cast %138 : vector<8x128xf32> to vector<1x8x128xf32>
    tpu.vector_store %arg17[%c0_58, %c0_59, %c0_60], %141 {strides = array<i32>} : memref<2x8x128xf32, #tpu.memory_space<vmem>>, vector<1x8x128xf32>,
    %142 = vector.extract_strided_slice %0 {offsets = [1, 0, 0], sizes = [1, 8, 128], strides = [1, 1, 1]} : vector<2x8x128xf32> to vector<1x8x128xf32>
    %143 = vector.shape_cast %142 : vector<1x8x128xf32> to vector<8x128xf32>
    %144 = vector.extract_strided_slice %1 {offsets = [1, 0, 0], sizes = [1, 8, 128], strides = [1, 1, 1]} : vector<2x8x128xf32> to vector<1x8x128xf32>
    %145 = vector.shape_cast %144 : vector<1x8x128xf32> to vector<8x128xf32>
    %cst_61 = arith.constant dense<0.000000e+00> : vector<8x128xf32>
    %146 = tpu.matmul %35, %143, %cst_61 {dimension_numbers = #tpu.dot_dimension_numbers<[1], [0], [0], [1], [0, 0, 1, 1], [], []>} : vector<8x8xf32>, vector<8x128xf32>, vector<8x128xf32> -> vector<8x128xf32>
    %cst_62 = arith.constant dense<0.000000e+00> : vector<8x128xf32>
    %147 = tpu.matmul %36, %145, %cst_62 {dimension_numbers = #tpu.dot_dimension_numbers<[1], [0], [0], [1], [0, 0, 1, 1], [], []>} : vector<8x8xf32>, vector<8x128xf32>, vector<8x128xf32> -> vector<8x128xf32>
    %148 = arith.addf %146, %147 : vector<8x128xf32>
    %149 = arith.addf %148, %41 : vector<8x128xf32>
    %cst_63 = arith.constant 0.000000e+00 : f32
    %150 = vector.broadcast %cst_63 : f32 to vector<8x128xf32>
    %151 = arith.maximumf %149, %150 : vector<8x128xf32>
    %cst_64 = arith.constant dense<0.000000e+00> : vector<8x128xf32>
    %152 = tpu.matmul %37, %151, %cst_64 {dimension_numbers = #tpu.dot_dimension_numbers<[1], [0], [0], [1], [0, 0, 1, 1], [], []>} : vector<8x8xf32>, vector<8x128xf32>, vector<8x128xf32> -> vector<8x128xf32>
    %153 = arith.addf %152, %44 : vector<8x128xf32>
    %cst_65 = arith.constant dense<0xFF800000> : vector<128xf32>
    %154 = vector.multi_reduction <maximumf>, %143, %cst_65 [0] : vector<8x128xf32> to vector<128xf32>
    %155 = vector.shape_cast %154 : vector<128xf32> to vector<1x128xf32>
    %cst_66 = arith.constant dense<0xFF800000> : vector<128xf32>
    %156 = vector.multi_reduction <maximumf>, %145, %cst_66 [0] : vector<8x128xf32> to vector<128xf32>
    %157 = vector.shape_cast %156 : vector<128xf32> to vector<1x128xf32>
    %158 = arith.maximumf %155, %157 : vector<1x128xf32>
    %cst_67 = arith.constant dense<0.000000e+00> : vector<128xf32>
    %159 = vector.multi_reduction <add>, %143, %cst_67 [0] : vector<8x128xf32> to vector<128xf32>
    %160 = vector.shape_cast %159 : vector<128xf32> to vector<1x128xf32>
    %cst_68 = arith.constant dense<0.000000e+00> : vector<128xf32>
    %161 = vector.multi_reduction <add>, %145, %cst_68 [0] : vector<8x128xf32> to vector<128xf32>
    %162 = vector.shape_cast %161 : vector<128xf32> to vector<1x128xf32>
    %163 = arith.addf %160, %162 : vector<1x128xf32>
    %cst_69 = arith.constant 6.250000e-02 : f32
    %164 = vector.broadcast %cst_69 : f32 to vector<1x128xf32>
    %165 = arith.mulf %163, %164 : vector<1x128xf32>
    %c1_i32_70 = arith.constant 1 : i32
    %166 = tpu.dynamic_rotate %158 by %c1_i32_70 dim 1 : vector<1x128xf32>, i32 -> vector<1x128xf32>
    %cst_71 = arith.constant 0.000000e+00 : f32
    %167 = vector.broadcast %cst_71 : f32 to vector<1x128xf32>
    %168 = arith.select %60, %166, %167 : vector<1x128xi1>, vector<1x128xf32>
    %c127_i32_72 = arith.constant 127 : i32
    %169 = tpu.dynamic_rotate %158 by %c127_i32_72 dim 1 : vector<1x128xf32>, i32 -> vector<1x128xf32>
    %cst_73 = arith.constant 0.000000e+00 : f32
    %170 = vector.broadcast %cst_73 : f32 to vector<1x128xf32>
    %171 = arith.select %62, %169, %170 : vector<1x128xi1>, vector<1x128xf32>
    %c1_i32_74 = arith.constant 1 : i32
    %172 = tpu.dynamic_rotate %165 by %c1_i32_74 dim 1 : vector<1x128xf32>, i32 -> vector<1x128xf32>
    %cst_75 = arith.constant 0.000000e+00 : f32
    %173 = vector.broadcast %cst_75 : f32 to vector<1x128xf32>
    %174 = arith.select %60, %172, %173 : vector<1x128xi1>, vector<1x128xf32>
    %c127_i32_76 = arith.constant 127 : i32
    %175 = tpu.dynamic_rotate %165 by %c127_i32_76 dim 1 : vector<1x128xf32>, i32 -> vector<1x128xf32>
    %cst_77 = arith.constant 0.000000e+00 : f32
    %176 = vector.broadcast %cst_77 : f32 to vector<1x128xf32>
    %177 = arith.select %62, %175, %176 : vector<1x128xi1>, vector<1x128xf32>
    %178 = vector.broadcast %52 : vector<8x1xf32> to vector<8x128xf32>
    %179 = vector.broadcast %168 : vector<1x128xf32> to vector<8x128xf32>
    %180 = arith.mulf %178, %179 : vector<8x128xf32>
    %181 = vector.broadcast %53 : vector<8x1xf32> to vector<8x128xf32>
    %182 = vector.broadcast %158 : vector<1x128xf32> to vector<8x128xf32>
    %183 = arith.mulf %181, %182 : vector<8x128xf32>
    %184 = arith.addf %180, %183 : vector<8x128xf32>
    %185 = vector.broadcast %54 : vector<8x1xf32> to vector<8x128xf32>
    %186 = vector.broadcast %171 : vector<1x128xf32> to vector<8x128xf32>
    %187 = arith.mulf %185, %186 : vector<8x128xf32>
    %188 = arith.addf %184, %187 : vector<8x128xf32>
    %189 = vector.broadcast %55 : vector<8x1xf32> to vector<8x128xf32>
    %190 = vector.broadcast %174 : vector<1x128xf32> to vector<8x128xf32>
    %191 = arith.mulf %189, %190 : vector<8x128xf32>
    %192 = arith.addf %188, %191 : vector<8x128xf32>
    %193 = vector.broadcast %56 : vector<8x1xf32> to vector<8x128xf32>
    %194 = vector.broadcast %165 : vector<1x128xf32> to vector<8x128xf32>
    %195 = arith.mulf %193, %194 : vector<8x128xf32>
    %196 = arith.addf %192, %195 : vector<8x128xf32>
    %197 = vector.broadcast %57 : vector<8x1xf32> to vector<8x128xf32>
    %198 = vector.broadcast %177 : vector<1x128xf32> to vector<8x128xf32>
    %199 = arith.mulf %197, %198 : vector<8x128xf32>
    %200 = arith.addf %196, %199 : vector<8x128xf32>
    %201 = arith.addf %200, %47 : vector<8x128xf32>
    %202 = vector.extract_strided_slice %34 {offsets = [0, 1], sizes = [8, 1], strides = [1, 1]} : vector<8x2xf32> to vector<8x1xf32>
    %203 = vector.broadcast %202 : vector<8x1xf32> to vector<8x128xf32>
    %204 = arith.addf %153, %203 : vector<8x128xf32>
    %205 = arith.addf %204, %201 : vector<8x128xf32>
    %cst_78 = arith.constant dense<0.000000e+00> : vector<16x128xf32>
    %206 = tpu.matmul %38, %205, %cst_78 {dimension_numbers = #tpu.dot_dimension_numbers<[1], [0], [0], [1], [0, 0, 1, 1], [], []>} : vector<16x8xf32>, vector<8x128xf32>, vector<16x128xf32> -> vector<16x128xf32>
    %207 = arith.addf %206, %50 : vector<16x128xf32>
    %208 = arith.negf %207 : vector<16x128xf32>
    %209 = math.exp %208 : vector<16x128xf32>
    %cst_79 = arith.constant 1.000000e+00 : f32
    %210 = vector.broadcast %cst_79 : f32 to vector<16x128xf32>
    %211 = arith.addf %210, %209 : vector<16x128xf32>
    %212 = arith.divf %210, %211 : vector<16x128xf32>
    %213 = vector.extract_strided_slice %212 {offsets = [0, 0], sizes = [8, 128], strides = [1, 1]} : vector<16x128xf32> to vector<8x128xf32>
    %214 = arith.mulf %143, %213 : vector<8x128xf32>
    %215 = vector.extract_strided_slice %212 {offsets = [8, 0], sizes = [8, 128], strides = [1, 1]} : vector<16x128xf32> to vector<8x128xf32>
    %216 = arith.mulf %145, %215 : vector<8x128xf32>
    %217 = arith.addf %214, %216 : vector<8x128xf32>
    %c1 = arith.constant 1 : index
    %c0_80 = arith.constant 0 : index
    %c0_81 = arith.constant 0 : index
    %218 = vector.load %arg17[%c1, %c0_80, %c0_81] : memref<2x8x128xf32, #tpu.memory_space<vmem>>, vector<1x8x128xf32>
    %219 = vector.shape_cast %218 : vector<1x8x128xf32> to vector<8x128xf32>
    %220 = vector.shape_cast %217 : vector<8x128xf32> to vector<1x8x128xf32>
    tpu.vector_store %arg17[%c1, %c0_80, %c0_81], %220 {strides = array<i32>} : memref<2x8x128xf32, #tpu.memory_space<vmem>>, vector<1x8x128xf32>,
    return
  }
  func.func @transform_0(%arg0: i32) -> (i32, i32, i32) {
    %c0_i32 = arith.constant 0 : i32
    %c0_i32_0 = arith.constant 0 : i32
    %c0_i32_1 = arith.constant 0 : i32
    return %arg0, %c0_i32, %c0_i32_0 : i32, i32, i32
  }
  func.func @transform_1(%arg0: i32) -> (i32, i32, i32) {
    %c0_i32 = arith.constant 0 : i32
    %c0_i32_0 = arith.constant 0 : i32
    %c0_i32_1 = arith.constant 0 : i32
    return %arg0, %c0_i32, %c0_i32_0 : i32, i32, i32
  }
  func.func @transform_2(%arg0: i32) -> (i32, i32) {
    %c0_i32 = arith.constant 0 : i32
    %c0_i32_0 = arith.constant 0 : i32
    %c0_i32_1 = arith.constant 0 : i32
    return %c0_i32, %c0_i32_0 : i32, i32
  }
  func.func @transform_3(%arg0: i32) -> (i32, i32) {
    %c0_i32 = arith.constant 0 : i32
    %c0_i32_0 = arith.constant 0 : i32
    %c0_i32_1 = arith.constant 0 : i32
    return %c0_i32, %c0_i32_0 : i32, i32
  }
  func.func @transform_4(%arg0: i32) -> (i32, i32) {
    %c0_i32 = arith.constant 0 : i32
    %c0_i32_0 = arith.constant 0 : i32
    %c0_i32_1 = arith.constant 0 : i32
    return %c0_i32, %c0_i32_0 : i32, i32
  }
  func.func @transform_5(%arg0: i32) -> (i32, i32) {
    %c0_i32 = arith.constant 0 : i32
    %c0_i32_0 = arith.constant 0 : i32
    %c0_i32_1 = arith.constant 0 : i32
    return %c0_i32, %c0_i32_0 : i32, i32
  }
  func.func @transform_6(%arg0: i32) -> (i32, i32) {
    %c0_i32 = arith.constant 0 : i32
    %c0_i32_0 = arith.constant 0 : i32
    %c0_i32_1 = arith.constant 0 : i32
    return %c0_i32, %c0_i32_0 : i32, i32
  }
  func.func @transform_7(%arg0: i32) -> (i32, i32) {
    %c0_i32 = arith.constant 0 : i32
    %c0_i32_0 = arith.constant 0 : i32
    %c0_i32_1 = arith.constant 0 : i32
    return %c0_i32, %c0_i32_0 : i32, i32
  }
  func.func @transform_8(%arg0: i32) -> (i32, i32) {
    %c0_i32 = arith.constant 0 : i32
    %c0_i32_0 = arith.constant 0 : i32
    %c0_i32_1 = arith.constant 0 : i32
    return %c0_i32, %c0_i32_0 : i32, i32
  }
  func.func @transform_9(%arg0: i32) -> (i32, i32) {
    %c0_i32 = arith.constant 0 : i32
    %c0_i32_0 = arith.constant 0 : i32
    %c0_i32_1 = arith.constant 0 : i32
    return %c0_i32, %c0_i32_0 : i32, i32
  }
  func.func @transform_10(%arg0: i32) -> (i32, i32) {
    %c0_i32 = arith.constant 0 : i32
    %c0_i32_0 = arith.constant 0 : i32
    %c0_i32_1 = arith.constant 0 : i32
    return %c0_i32, %c0_i32_0 : i32, i32
  }
  func.func @transform_11(%arg0: i32) -> (i32, i32) {
    %c0_i32 = arith.constant 0 : i32
    %c0_i32_0 = arith.constant 0 : i32
    %c0_i32_1 = arith.constant 0 : i32
    return %c0_i32, %c0_i32_0 : i32, i32
  }
  func.func @transform_12(%arg0: i32) -> (i32, i32) {
    %c0_i32 = arith.constant 0 : i32
    %c0_i32_0 = arith.constant 0 : i32
    %c0_i32_1 = arith.constant 0 : i32
    return %c0_i32, %c0_i32_0 : i32, i32
  }
  func.func @transform_13(%arg0: i32) -> (i32, i32) {
    %c0_i32 = arith.constant 0 : i32
    %c0_i32_0 = arith.constant 0 : i32
    %c0_i32_1 = arith.constant 0 : i32
    return %c0_i32, %c0_i32_0 : i32, i32
  }
  func.func @transform_14(%arg0: i32) -> (i32, i32) {
    %c0_i32 = arith.constant 0 : i32
    %c0_i32_0 = arith.constant 0 : i32
    %c0_i32_1 = arith.constant 0 : i32
    return %c0_i32, %c0_i32_0 : i32, i32
  }
  func.func @transform_15(%arg0: i32) -> (i32, i32) {
    %c0_i32 = arith.constant 0 : i32
    %c0_i32_0 = arith.constant 0 : i32
    %c0_i32_1 = arith.constant 0 : i32
    return %c0_i32, %c0_i32_0 : i32, i32
  }
  func.func @transform_16(%arg0: i32) -> (i32, i32, i32) {
    %c0_i32 = arith.constant 0 : i32
    %c0_i32_0 = arith.constant 0 : i32
    %c0_i32_1 = arith.constant 0 : i32
    return %arg0, %c0_i32, %c0_i32_0 : i32, i32, i32
  }
}

</mosaic_0001>

<llo_original>
// kernel: tpu_custom_call.1
$region0: #{tpu_custom_call.1}
  #allocation0 [shape = 'u32[]', space=smem, size = 0x4, offset = 0x4, fixed_abs, tag = 'smem constant byte address 0x4 - core index']
  #allocation1 [shape = 'u32[144,128]{1,0:T(1,128)}', space=vmem, size = 0x12000, scoped, tag = 'internal scratch']
  %s0 = inlined_call_operand.vmem [shape: f32[4,8,128], index: 0, kind: input, shape index: {}]
  %s1 = inlined_call_operand.vmem [shape: f32[4,8,128], index: 1, kind: input, shape index: {}]
  %s2 = inlined_call_operand.vmem [shape: f32[8,8], index: 2, kind: input, shape index: {}]
  %s3 = inlined_call_operand.vmem [shape: f32[8,8], index: 3, kind: input, shape index: {}]
  %s4 = inlined_call_operand.vmem [shape: f32[8,1], index: 4, kind: input, shape index: {}]
  %s5 = inlined_call_operand.vmem [shape: f32[8,8], index: 5, kind: input, shape index: {}]
  %s6 = inlined_call_operand.vmem [shape: f32[8,1], index: 6, kind: input, shape index: {}]
  %s7 = inlined_call_operand.vmem [shape: f32[8,8], index: 7, kind: input, shape index: {}]
  %s8 = inlined_call_operand.vmem [shape: f32[8,8], index: 8, kind: input, shape index: {}]
  %s9 = inlined_call_operand.vmem [shape: f32[8,1], index: 9, kind: input, shape index: {}]
  %s10 = inlined_call_operand.vmem [shape: f32[8,8], index: 10, kind: input, shape index: {}]
  %s11 = inlined_call_operand.vmem [shape: f32[8,1], index: 11, kind: input, shape index: {}]
  %s12 = inlined_call_operand.vmem [shape: f32[8,6], index: 12, kind: input, shape index: {}]
  %s13 = inlined_call_operand.vmem [shape: f32[8,1], index: 13, kind: input, shape index: {}]
  %s14 = inlined_call_operand.vmem [shape: f32[16,8], index: 14, kind: input, shape index: {}]
  %s15 = inlined_call_operand.vmem [shape: f32[16,1], index: 15, kind: input, shape index: {}]
  %s16 = inlined_call_operand.hbm [shape: f32[4,8,128], index: 16, kind: output, shape index: {}]
  %s17 = sld [smem:[#allocation0]]
  $region97: #{tpu_custom_call.1} parent=0
    _
  %s19 = ssub.s32 1, %s17
  %s20 = scalar_select 0, %s19, %s17
  $region1: #{tpu_custom_call.1} parent=0
    #allocation2 [shape = 'u8[16384]{0}', space=vmem, size = 0x4000, scoped, tag = 'output window, operand 0']
    #allocation3 [shape = 's32[2]{0}', space=sflag, size = 0x8, scoped, tag = 'scoped memory for tpu_custom_call.1']
    %21 = vsyncpa [#allocation3], 0
    %s22 = scalar_lea.sflag [#allocation3], 1
    %23 = vsyncpa %s22, 0
    loop: start=0, step=1, limit=4
    $region2: #{tpu_custom_call.1} parent=1 // loop_pre_header
      _
    $region3: #{tpu_custom_call.1} parent=1 // loop_header
      %s25 = sphi 0, %s29
      %p26 = scmp.ge.s32.totalorder %s25, 4
      %s35 = sphi 0, %s37
      %s38 = sphi 0, %s35
      %s39 = sphi 0, %s38
      %s55 = sphi 0, %s39
      %s61 = sphi 0, %s63
      %s64 = sphi 0, %s61
      %s65 = sphi 0, %s64
      %s81 = sphi 0, %s65
      %s85 = sphi 0, %s85
      %s87 = sphi 0, %s85
      %s88 = sphi 0, %s87
      %s102 = sphi 0, %s88
      %s106 = sphi 0, %s106
      %s108 = sphi 0, %s106
      %s109 = sphi 0, %s108
      %s123 = sphi 0, %s109
      %s127 = sphi 0, %s127
      %s129 = sphi 0, %s127
      %s130 = sphi 0, %s129
      %s144 = sphi 0, %s130
      %s148 = sphi 0, %s148
      %s150 = sphi 0, %s148
      %s151 = sphi 0, %s150
      %s165 = sphi 0, %s151
      %s169 = sphi 0, %s169
      %s171 = sphi 0, %s169
      %s172 = sphi 0, %s171
      %s186 = sphi 0, %s172
      %s190 = sphi 0, %s190
      %s192 = sphi 0, %s190
      %s193 = sphi 0, %s192
      %s207 = sphi 0, %s193
      %s211 = sphi 0, %s211
      %s213 = sphi 0, %s211
      %s214 = sphi 0, %s213
      %s228 = sphi 0, %s214
      %s232 = sphi 0, %s232
      %s234 = sphi 0, %s232
      %s235 = sphi 0, %s234
      %s249 = sphi 0, %s235
      %s253 = sphi 0, %s253
      %s255 = sphi 0, %s253
      %s256 = sphi 0, %s255
      %s270 = sphi 0, %s256
      %s274 = sphi 0, %s274
      %s276 = sphi 0, %s274
      %s277 = sphi 0, %s276
      %s291 = sphi 0, %s277
      %s295 = sphi 0, %s295
      %s297 = sphi 0, %s295
      %s298 = sphi 0, %s297
      %s312 = sphi 0, %s298
      %s316 = sphi 0, %s316
      %s318 = sphi 0, %s316
      %s319 = sphi 0, %s318
      %s333 = sphi 0, %s319
      %s337 = sphi 0, %s337
      %s339 = sphi 0, %s337
      %s340 = sphi 0, %s339
      %s354 = sphi 0, %s340
      %s358 = sphi 0, %s358
      %s360 = sphi 0, %s358
      %s361 = sphi 0, %s360
      %s375 = sphi 0, %s361
      %s381 = sphi 0, %s383
      %s384 = sphi 0, %s381
      %s385 = sphi 0, %s384
      %s401 = sphi 0, %s385
    $region4: #{tpu_custom_call.1} parent=1 // loop_header_branch
      %28 = sbr.rel (%p26) target = $region8
    $region5: #{tpu_custom_call.1} parent=1 // loop_body
      %s30 = ssub.s32 %s25, 1
      %s31 = ssub.s32 %s25, 2
      %s32 = sadd.s32 %s25, 1
      %s33 = ssub.s32 %s25, %s32
      %p34 = scmp.eq.s32.totalorder %s33, 0
      %s36 = sadd.s32 %s35, 1
      %s37 = scalar_select %p34, %s35, %s36
      %p40 = pneg %p34
      %p41 = scmp.eq.s32.totalorder %s25, 1
      %p42 = por %p40, %p41
      %p43 = scmp.ne.s32.totalorder %s35, %s38
      %p44 = scmp.eq.s32.totalorder %s25, 0
      %p45 = por %p43, %p44
      %p46 = scmp.ne.s32.totalorder %s35, %s38
      %p47 = scmp.eq.s32.totalorder %s30, 1
      %p48 = por %p46, %p47
      %p49 = scmp.ne.s32.totalorder %s38, %s39
      %p50 = scmp.eq.s32.totalorder %s30, 0
      %p51 = por %p49, %p50
      %p52 = scmp.ne.s32.totalorder %s38, %s39
      %p53 = scmp.eq.s32.totalorder %s31, 1
      %p54 = por %p52, %p53
      %p56 = scmp.ne.s32.totalorder %s39, %s55
      %p57 = scmp.eq.s32.totalorder %s31, 0
      %p58 = por %p56, %p57
      %s59 = ssub.s32 %s25, %s32
      %p60 = scmp.eq.s32.totalorder %s59, 0
      %s62 = sadd.s32 %s61, 1
      %s63 = scalar_select %p60, %s61, %s62
      %p66 = pneg %p60
      %p67 = scmp.eq.s32.totalorder %s25, 1
      %p68 = por %p66, %p67
      %p69 = scmp.ne.s32.totalorder %s61, %s64
      %p70 = scmp.eq.s32.totalorder %s25, 0
      %p71 = por %p69, %p70
      %p72 = scmp.ne.s32.totalorder %s61, %s64
      %p73 = scmp.eq.s32.totalorder %s30, 1
      %p74 = por %p72, %p73
      %p75 = scmp.ne.s32.totalorder %s64, %s65
      %p76 = scmp.eq.s32.totalorder %s30, 0
      %p77 = por %p75, %p76
      %p78 = scmp.ne.s32.totalorder %s64, %s65
      %p79 = scmp.eq.s32.totalorder %s31, 1
      %p80 = por %p78, %p79
      %p82 = scmp.ne.s32.totalorder %s65, %s81
      %p83 = scmp.eq.s32.totalorder %s31, 0
      %p84 = por %p82, %p83
      %s86 = sadd.s32 %s85, 1
      %p89 = scmp.eq.s32.totalorder %s25, 1
      %p90 = scmp.ne.s32.totalorder %s85, %s87
      %p91 = scmp.eq.s32.totalorder %s25, 0
      %p92 = por %p90, %p91
      %p93 = scmp.ne.s32.totalorder %s85, %s87
      %p94 = scmp.eq.s32.totalorder %s30, 1
      %p95 = por %p93, %p94
      %p96 = scmp.ne.s32.totalorder %s87, %s88
      %p97 = scmp.eq.s32.totalorder %s30, 0
      %p98 = por %p96, %p97
      %p99 = scmp.ne.s32.totalorder %s87, %s88
      %p100 = scmp.eq.s32.totalorder %s31, 1
      %p101 = por %p99, %p100
      %p103 = scmp.ne.s32.totalorder %s88, %s102
      %p104 = scmp.eq.s32.totalorder %s31, 0
      %p105 = por %p103, %p104
      %s107 = sadd.s32 %s106, 1
      %p110 = scmp.eq.s32.totalorder %s25, 1
      %p111 = scmp.ne.s32.totalorder %s106, %s108
      %p112 = scmp.eq.s32.totalorder %s25, 0
      %p113 = por %p111, %p112
      %p114 = scmp.ne.s32.totalorder %s106, %s108
      %p115 = scmp.eq.s32.totalorder %s30, 1
      %p116 = por %p114, %p115
      %p117 = scmp.ne.s32.totalorder %s108, %s109
      %p118 = scmp.eq.s32.totalorder %s30, 0
      %p119 = por %p117, %p118
      %p120 = scmp.ne.s32.totalorder %s108, %s109
      %p121 = scmp.eq.s32.totalorder %s31, 1
      %p122 = por %p120, %p121
      %p124 = scmp.ne.s32.totalorder %s109, %s123
      %p125 = scmp.eq.s32.totalorder %s31, 0
      %p126 = por %p124, %p125
      %s128 = sadd.s32 %s127, 1
      %p131 = scmp.eq.s32.totalorder %s25, 1
      %p132 = scmp.ne.s32.totalorder %s127, %s129
      %p133 = scmp.eq.s32.totalorder %s25, 0
      %p134 = por %p132, %p133
      %p135 = scmp.ne.s32.totalorder %s127, %s129
      %p136 = scmp.eq.s32.totalorder %s30, 1
      %p137 = por %p135, %p136
      %p138 = scmp.ne.s32.totalorder %s129, %s130
      %p139 = scmp.eq.s32.totalorder %s30, 0
      %p140 = por %p138, %p139
      %p141 = scmp.ne.s32.totalorder %s129, %s130
      %p142 = scmp.eq.s32.totalorder %s31, 1
      %p143 = por %p141, %p142
      %p145 = scmp.ne.s32.totalorder %s130, %s144
      %p146 = scmp.eq.s32.totalorder %s31, 0
      %p147 = por %p145, %p146
      %s149 = sadd.s32 %s148, 1
      %p152 = scmp.eq.s32.totalorder %s25, 1
      %p153 = scmp.ne.s32.totalorder %s148, %s150
      %p154 = scmp.eq.s32.totalorder %s25, 0
      %p155 = por %p153, %p154
      %p156 = scmp.ne.s32.totalorder %s148, %s150
      %p157 = scmp.eq.s32.totalorder %s30, 1
      %p158 = por %p156, %p157
      %p159 = scmp.ne.s32.totalorder %s150, %s151
      %p160 = scmp.eq.s32.totalorder %s30, 0
      %p161 = por %p159, %p160
      %p162 = scmp.ne.s32.totalorder %s150, %s151
      %p163 = scmp.eq.s32.totalorder %s31, 1
      %p164 = por %p162, %p163
      %p166 = scmp.ne.s32.totalorder %s151, %s165
      %p167 = scmp.eq.s32.totalorder %s31, 0
      %p168 = por %p166, %p167
      %s170 = sadd.s32 %s169, 1
      %p173 = scmp.eq.s32.totalorder %s25, 1
      %p174 = scmp.ne.s32.totalorder %s169, %s171
      %p175 = scmp.eq.s32.totalorder %s25, 0
      %p176 = por %p174, %p175
      %p177 = scmp.ne.s32.totalorder %s169, %s171
      %p178 = scmp.eq.s32.totalorder %s30, 1
      %p179 = por %p177, %p178
      %p180 = scmp.ne.s32.totalorder %s171, %s172
      %p181 = scmp.eq.s32.totalorder %s30, 0
      %p182 = por %p180, %p181
      %p183 = scmp.ne.s32.totalorder %s171, %s172
      %p184 = scmp.eq.s32.totalorder %s31, 1
      %p185 = por %p183, %p184
      %p187 = scmp.ne.s32.totalorder %s172, %s186
      %p188 = scmp.eq.s32.totalorder %s31, 0
      %p189 = por %p187, %p188
      %s191 = sadd.s32 %s190, 1
      %p194 = scmp.eq.s32.totalorder %s25, 1
      %p195 = scmp.ne.s32.totalorder %s190, %s192
      %p196 = scmp.eq.s32.totalorder %s25, 0
      %p197 = por %p195, %p196
      %p198 = scmp.ne.s32.totalorder %s190, %s192
      %p199 = scmp.eq.s32.totalorder %s30, 1
      %p200 = por %p198, %p199
      %p201 = scmp.ne.s32.totalorder %s192, %s193
      %p202 = scmp.eq.s32.totalorder %s30, 0
      %p203 = por %p201, %p202
      %p204 = scmp.ne.s32.totalorder %s192, %s193
      %p205 = scmp.eq.s32.totalorder %s31, 1
      %p206 = por %p204, %p205
      %p208 = scmp.ne.s32.totalorder %s193, %s207
      %p209 = scmp.eq.s32.totalorder %s31, 0
      %p210 = por %p208, %p209
      %s212 = sadd.s32 %s211, 1
      %p215 = scmp.eq.s32.totalorder %s25, 1
      %p216 = scmp.ne.s32.totalorder %s211, %s213
      %p217 = scmp.eq.s32.totalorder %s25, 0
      %p218 = por %p216, %p217
      %p219 = scmp.ne.s32.totalorder %s211, %s213
      %p220 = scmp.eq.s32.totalorder %s30, 1
      %p221 = por %p219, %p220
      %p222 = scmp.ne.s32.totalorder %s213, %s214
      %p223 = scmp.eq.s32.totalorder %s30, 0
      %p224 = por %p222, %p223
      %p225 = scmp.ne.s32.totalorder %s213, %s214
      %p226 = scmp.eq.s32.totalorder %s31, 1
      %p227 = por %p225, %p226
      %p229 = scmp.ne.s32.totalorder %s214, %s228
      %p230 = scmp.eq.s32.totalorder %s31, 0
      %p231 = por %p229, %p230
      %s233 = sadd.s32 %s232, 1
      %p236 = scmp.eq.s32.totalorder %s25, 1
      %p237 = scmp.ne.s32.totalorder %s232, %s234
      %p238 = scmp.eq.s32.totalorder %s25, 0
      %p239 = por %p237, %p238
      %p240 = scmp.ne.s32.totalorder %s232, %s234
      %p241 = scmp.eq.s32.totalorder %s30, 1
      %p242 = por %p240, %p241
      %p243 = scmp.ne.s32.totalorder %s234, %s235
      %p244 = scmp.eq.s32.totalorder %s30, 0
      %p245 = por %p243, %p244
      %p246 = scmp.ne.s32.totalorder %s234, %s235
      %p247 = scmp.eq.s32.totalorder %s31, 1
      %p248 = por %p246, %p247
      %p250 = scmp.ne.s32.totalorder %s235, %s249
      %p251 = scmp.eq.s32.totalorder %s31, 0
      %p252 = por %p250, %p251
      %s254 = sadd.s32 %s253, 1
      %p257 = scmp.eq.s32.totalorder %s25, 1
      %p258 = scmp.ne.s32.totalorder %s253, %s255
      %p259 = scmp.eq.s32.totalorder %s25, 0
      %p260 = por %p258, %p259
      %p261 = scmp.ne.s32.totalorder %s253, %s255
      %p262 = scmp.eq.s32.totalorder %s30, 1
      %p263 = por %p261, %p262
      %p264 = scmp.ne.s32.totalorder %s255, %s256
      %p265 = scmp.eq.s32.totalorder %s30, 0
      %p266 = por %p264, %p265
      %p267 = scmp.ne.s32.totalorder %s255, %s256
      %p268 = scmp.eq.s32.totalorder %s31, 1
      %p269 = por %p267, %p268
      %p271 = scmp.ne.s32.totalorder %s256, %s270
      %p272 = scmp.eq.s32.totalorder %s31, 0
      %p273 = por %p271, %p272
      %s275 = sadd.s32 %s274, 1
      %p278 = scmp.eq.s32.totalorder %s25, 1
      %p279 = scmp.ne.s32.totalorder %s274, %s276
      %p280 = scmp.eq.s32.totalorder %s25, 0
      %p281 = por %p279, %p280
      %p282 = scmp.ne.s32.totalorder %s274, %s276
      %p283 = scmp.eq.s32.totalorder %s30, 1
      %p284 = por %p282, %p283
      %p285 = scmp.ne.s32.totalorder %s276, %s277
      %p286 = scmp.eq.s32.totalorder %s30, 0
      %p287 = por %p285, %p286
      %p288 = scmp.ne.s32.totalorder %s276, %s277
      %p289 = scmp.eq.s32.totalorder %s31, 1
      %p290 = por %p288, %p289
      %p292 = scmp.ne.s32.totalorder %s277, %s291
      %p293 = scmp.eq.s32.totalorder %s31, 0
      %p294 = por %p292, %p293
      %s296 = sadd.s32 %s295, 1
      %p299 = scmp.eq.s32.totalorder %s25, 1
      %p300 = scmp.ne.s32.totalorder %s295, %s297
      %p301 = scmp.eq.s32.totalorder %s25, 0
      %p302 = por %p300, %p301
      %p303 = scmp.ne.s32.totalorder %s295, %s297
      %p304 = scmp.eq.s32.totalorder %s30, 1
      %p305 = por %p303, %p304
      %p306 = scmp.ne.s32.totalorder %s297, %s298
      %p307 = scmp.eq.s32.totalorder %s30, 0
      %p308 = por %p306, %p307
      %p309 = scmp.ne.s32.totalorder %s297, %s298
      %p310 = scmp.eq.s32.totalorder %s31, 1
      %p311 = por %p309, %p310
      %p313 = scmp.ne.s32.totalorder %s298, %s312
      %p314 = scmp.eq.s32.totalorder %s31, 0
      %p315 = por %p313, %p314
      %s317 = sadd.s32 %s316, 1
      %p320 = scmp.eq.s32.totalorder %s25, 1
      %p321 = scmp.ne.s32.totalorder %s316, %s318
      %p322 = scmp.eq.s32.totalorder %s25, 0
      %p323 = por %p321, %p322
      %p324 = scmp.ne.s32.totalorder %s316, %s318
      %p325 = scmp.eq.s32.totalorder %s30, 1
      %p326 = por %p324, %p325
      %p327 = scmp.ne.s32.totalorder %s318, %s319
      %p328 = scmp.eq.s32.totalorder %s30, 0
      %p329 = por %p327, %p328
      %p330 = scmp.ne.s32.totalorder %s318, %s319
      %p331 = scmp.eq.s32.totalorder %s31, 1
      %p332 = por %p330, %p331
      %p334 = scmp.ne.s32.totalorder %s319, %s333
      %p335 = scmp.eq.s32.totalorder %s31, 0
      %p336 = por %p334, %p335
      %s338 = sadd.s32 %s337, 1
      %p341 = scmp.eq.s32.totalorder %s25, 1
      %p342 = scmp.ne.s32.totalorder %s337, %s339
      %p343 = scmp.eq.s32.totalorder %s25, 0
      %p344 = por %p342, %p343
      %p345 = scmp.ne.s32.totalorder %s337, %s339
      %p346 = scmp.eq.s32.totalorder %s30, 1
      %p347 = por %p345, %p346
      %p348 = scmp.ne.s32.totalorder %s339, %s340
      %p349 = scmp.eq.s32.totalorder %s30, 0
      %p350 = por %p348, %p349
      %p351 = scmp.ne.s32.totalorder %s339, %s340
      %p352 = scmp.eq.s32.totalorder %s31, 1
      %p353 = por %p351, %p352
      %p355 = scmp.ne.s32.totalorder %s340, %s354
      %p356 = scmp.eq.s32.totalorder %s31, 0
      %p357 = por %p355, %p356
      %s359 = sadd.s32 %s358, 1
      %p362 = scmp.eq.s32.totalorder %s25, 1
      %p363 = scmp.ne.s32.totalorder %s358, %s360
      %p364 = scmp.eq.s32.totalorder %s25, 0
      %p365 = por %p363, %p364
      %p366 = scmp.ne.s32.totalorder %s358, %s360
      %p367 = scmp.eq.s32.totalorder %s30, 1
      %p368 = por %p366, %p367
      %p369 = scmp.ne.s32.totalorder %s360, %s361
      %p370 = scmp.eq.s32.totalorder %s30, 0
      %p371 = por %p369, %p370
      %p372 = scmp.ne.s32.totalorder %s360, %s361
      %p373 = scmp.eq.s32.totalorder %s31, 1
      %p374 = por %p372, %p373
      %p376 = scmp.ne.s32.totalorder %s361, %s375
      %p377 = scmp.eq.s32.totalorder %s31, 0
      %p378 = por %p376, %p377
      %s379 = ssub.s32 %s25, %s32
      %p380 = scmp.eq.s32.totalorder %s379, 0
      %s382 = sadd.s32 %s381, 1
      %s383 = scalar_select %p380, %s381, %s382
      %p386 = pneg %p380
      %p387 = scmp.eq.s32.totalorder %s25, 1
      %p388 = por %p386, %p387
      %p389 = scmp.ne.s32.totalorder %s381, %s384
      %p390 = scmp.eq.s32.totalorder %s25, 0
      %p391 = por %p389, %p390
      %p392 = scmp.ne.s32.totalorder %s381, %s384
      %p393 = scmp.eq.s32.totalorder %s30, 1
      %p394 = por %p392, %p393
      %p395 = scmp.ne.s32.totalorder %s384, %s385
      %p396 = scmp.eq.s32.totalorder %s30, 0
      %p397 = por %p395, %p396
      %p398 = scmp.ne.s32.totalorder %s384, %s385
      %p399 = scmp.eq.s32.totalorder %s31, 1
      %p400 = por %p398, %p399
      %p402 = scmp.ne.s32.totalorder %s385, %s401
      %p403 = scmp.eq.s32.totalorder %s31, 0
      %p404 = por %p402, %p403
      %p405 = scmp.le.s32.totalorder 1, %s25
      %p406 = scmp.lt.s32.totalorder %s25, 3
      %p407 = pnand %p405, %p406
      %p408 = pneg %p407
      // Predicated region
      $region9: #{tpu_custom_call.1} parent=5 // pred_check
        _
      $region10: #{tpu_custom_call.1} parent=5 // pred_check_branch
        %410 = sbr.rel (%p407) target = $region12
      $region11: #{tpu_custom_call.1} parent=5 // pred_region
        %s411 = ssub.s32 %s25, 1
        // Predicated region
        $region13: #{tpu_custom_call.1} parent=11 // pred_check
          %p412 = pneg %p98
        $region14: #{tpu_custom_call.1} parent=11 // pred_check_branch
          %414 = sbr.rel (%p412) target = $region16
        $region15: #{tpu_custom_call.1} parent=11 // pred_region
          _
        $region16: #{tpu_custom_call.1} parent=11 // pred_fallthru
          _
        // Predicated region
        $region17: #{tpu_custom_call.1} parent=11 // pred_check
          %p415 = pneg %p119
        $region18: #{tpu_custom_call.1} parent=11 // pred_check_branch
          %417 = sbr.rel (%p415) target = $region20
        $region19: #{tpu_custom_call.1} parent=11 // pred_region
          _
        $region20: #{tpu_custom_call.1} parent=11 // pred_fallthru
          _
        // Predicated region
        $region21: #{tpu_custom_call.1} parent=11 // pred_check
          %p418 = pneg %p140
        $region22: #{tpu_custom_call.1} parent=11 // pred_check_branch
          %420 = sbr.rel (%p418) target = $region24
        $region23: #{tpu_custom_call.1} parent=11 // pred_region
          _
        $region24: #{tpu_custom_call.1} parent=11 // pred_fallthru
          _
        // Predicated region
        $region25: #{tpu_custom_call.1} parent=11 // pred_check
          %p421 = pneg %p161
        $region26: #{tpu_custom_call.1} parent=11 // pred_check_branch
          %423 = sbr.rel (%p421) target = $region28
        $region27: #{tpu_custom_call.1} parent=11 // pred_region
          _
        $region28: #{tpu_custom_call.1} parent=11 // pred_fallthru
          _
        // Predicated region
        $region29: #{tpu_custom_call.1} parent=11 // pred_check
          %p424 = pneg %p182
        $region30: #{tpu_custom_call.1} parent=11 // pred_check_branch
          %426 = sbr.rel (%p424) target = $region32
        $region31: #{tpu_custom_call.1} parent=11 // pred_region
          _
        $region32: #{tpu_custom_call.1} parent=11 // pred_fallthru
          _
        // Predicated region
        $region33: #{tpu_custom_call.1} parent=11 // pred_check
          %p427 = pneg %p203
        $region34: #{tpu_custom_call.1} parent=11 // pred_check_branch
          %429 = sbr.rel (%p427) target = $region36
        $region35: #{tpu_custom_call.1} parent=11 // pred_region
          _
        $region36: #{tpu_custom_call.1} parent=11 // pred_fallthru
          _
        // Predicated region
        $region37: #{tpu_custom_call.1} parent=11 // pred_check
          %p430 = pneg %p224
        $region38: #{tpu_custom_call.1} parent=11 // pred_check_branch
          %432 = sbr.rel (%p430) target = $region40
        $region39: #{tpu_custom_call.1} parent=11 // pred_region
          _
        $region40: #{tpu_custom_call.1} parent=11 // pred_fallthru
          _
        // Predicated region
        $region41: #{tpu_custom_call.1} parent=11 // pred_check
          %p433 = pneg %p245
        $region42: #{tpu_custom_call.1} parent=11 // pred_check_branch
          %435 = sbr.rel (%p433) target = $region44
        $region43: #{tpu_custom_call.1} parent=11 // pred_region
          _
        $region44: #{tpu_custom_call.1} parent=11 // pred_fallthru
          _
        // Predicated region
        $region45: #{tpu_custom_call.1} parent=11 // pred_check
          %p436 = pneg %p266
        $region46: #{tpu_custom_call.1} parent=11 // pred_check_branch
          %438 = sbr.rel (%p436) target = $region48
        $region47: #{tpu_custom_call.1} parent=11 // pred_region
          _
        $region48: #{tpu_custom_call.1} parent=11 // pred_fallthru
          _
        // Predicated region
        $region49: #{tpu_custom_call.1} parent=11 // pred_check
          %p439 = pneg %p287
        $region50: #{tpu_custom_call.1} parent=11 // pred_check_branch
          %441 = sbr.rel (%p439) target = $region52
        $region51: #{tpu_custom_call.1} parent=11 // pred_region
          _
        $region52: #{tpu_custom_call.1} parent=11 // pred_fallthru
          _
        // Predicated region
        $region53: #{tpu_custom_call.1} parent=11 // pred_check
          %p442 = pneg %p308
        $region54: #{tpu_custom_call.1} parent=11 // pred_check_branch
          %444 = sbr.rel (%p442) target = $region56
        $region55: #{tpu_custom_call.1} parent=11 // pred_region
          _
        $region56: #{tpu_custom_call.1} parent=11 // pred_fallthru
          _
        // Predicated region
        $region57: #{tpu_custom_call.1} parent=11 // pred_check
          %p445 = pneg %p329
        $region58: #{tpu_custom_call.1} parent=11 // pred_check_branch
          %447 = sbr.rel (%p445) target = $region60
        $region59: #{tpu_custom_call.1} parent=11 // pred_region
          _
        $region60: #{tpu_custom_call.1} parent=11 // pred_fallthru
          _
        // Predicated region
        $region61: #{tpu_custom_call.1} parent=11 // pred_check
          %p448 = pneg %p350
        $region62: #{tpu_custom_call.1} parent=11 // pred_check_branch
          %450 = sbr.rel (%p448) target = $region64
        $region63: #{tpu_custom_call.1} parent=11 // pred_region
          _
        $region64: #{tpu_custom_call.1} parent=11 // pred_fallthru
          _
        // Predicated region
        $region65: #{tpu_custom_call.1} parent=11 // pred_check
          %p451 = pneg %p371
        $region66: #{tpu_custom_call.1} parent=11 // pred_check_branch
          %453 = sbr.rel (%p451) target = $region68
        $region67: #{tpu_custom_call.1} parent=11 // pred_region
          _
        $region68: #{tpu_custom_call.1} parent=11 // pred_fallthru
          _
      $region12: #{tpu_custom_call.1} parent=5 // pred_fallthru
        _
      %p454 = scmp.lt.s32.totalorder %s25, 2
      // Predicated region
      $region69: #{tpu_custom_call.1} parent=5 // pred_check
        %p455 = pneg %p454
      $region70: #{tpu_custom_call.1} parent=5 // pred_check_branch
        %457 = sbr.rel (%p455) target = $region72
      $region71: #{tpu_custom_call.1} parent=5 // pred_region
        // Predicated region
        $region73: #{tpu_custom_call.1} parent=71 // pred_check
          %p458 = pneg %p45
        $region74: #{tpu_custom_call.1} parent=71 // pred_check_branch
          %460 = sbr.rel (%p458) target = $region76
        $region75: #{tpu_custom_call.1} parent=71 // pred_region
          %s461 = smul.u32 2, %s25
          %p462 = scmp.lt.s32.totalorder %s461, 3
          %s463 = scalar_select %p462, %s461, 3
          %s464 = smul.addr %s463, 8
          %s465 = scalar_lea.vmem %s0, %s464
          %s466 = smul.u32 2, %s25
        $region76: #{tpu_custom_call.1} parent=71 // pred_fallthru
          _
        // Predicated region
        $region77: #{tpu_custom_call.1} parent=71 // pred_check
          %p467 = pneg %p71
        $region78: #{tpu_custom_call.1} parent=71 // pred_check_branch
          %469 = sbr.rel (%p467) target = $region80
        $region79: #{tpu_custom_call.1} parent=71 // pred_region
          %s470 = smul.u32 2, %s25
          %p471 = scmp.lt.s32.totalorder %s470, 3
          %s472 = scalar_select %p471, %s470, 3
          %s473 = smul.addr %s472, 8
          %s474 = scalar_lea.vmem %s1, %s473
          %s475 = smul.u32 2, %s25
        $region80: #{tpu_custom_call.1} parent=71 // pred_fallthru
          _
      $region72: #{tpu_custom_call.1} parent=5 // pred_fallthru
        _
      %p476 = scmp.le.s32.totalorder 1, %s25
      %p477 = scmp.lt.s32.totalorder %s25, 3
      %p478 = pnand %p476, %p477
      %p479 = pneg %p478
      // Predicated region
      $region81: #{tpu_custom_call.1} parent=5 // pred_check
        _
      $region82: #{tpu_custom_call.1} parent=5 // pred_check_branch
        %481 = sbr.rel (%p478) target = $region84
      $region83: #{tpu_custom_call.1} parent=5 // pred_region
        %s482 = ssub.s32 %s25, 1
        %s483 = smul.u32 2, %s30
        %p484 = scmp.lt.s32.totalorder %s483, 3
        %s485 = scalar_select %p484, %s483, 3
        %s486 = smul.addr %s485, 8
        %s487 = scalar_lea.vmem %s0, %s486
        %p488 = pneg %p51
        %p489 = pneg %p48
        %s490 = smul.u32 2, %s30
        %p491 = scmp.lt.s32.totalorder %s490, 3
        %s492 = scalar_select %p491, %s490, 3
        %s493 = smul.addr %s492, 8
        %s494 = scalar_lea.vmem %s1, %s493
        %p495 = pneg %p77
        %p496 = pneg %p74
        %p497 = pneg %p98
        %p498 = pneg %p95
        %p499 = pneg %p119
        %p500 = pneg %p116
        %p501 = pneg %p140
        %p502 = pneg %p137
        %p503 = pneg %p161
        %p504 = pneg %p158
        %p505 = pneg %p182
        %p506 = pneg %p179
        %p507 = pneg %p203
        %p508 = pneg %p200
        %p509 = pneg %p224
        %p510 = pneg %p221
        %p511 = pneg %p245
        %p512 = pneg %p242
        %p513 = pneg %p266
        %p514 = pneg %p263
        %p515 = pneg %p287
        %p516 = pneg %p284
        %p517 = pneg %p308
        %p518 = pneg %p305
        %p519 = pneg %p329
        %p520 = pneg %p326
        %p521 = pneg %p350
        %p522 = pneg %p347
        %p523 = pneg %p371
        %p524 = pneg %p368
        %p525 = pneg %p397
        %p526 = pneg %p394
        %s527 = sand.u32 %s384, 1
        %s528 = scalar_lea.sflag [#allocation3], %s527
        %s529 = sand.u32 %s384, 1
        %s530 = smul.addr %s529, 16
        %s531 = scalar_lea.vmem [#allocation2], %s530
        %s532 = smul.u32 2, %s30
        %p533 = scmp.lt.s32.totalorder %s532, 3
        %s534 = scalar_select %p533, %s532, 3
        %s535 = smul.addr %s534, 8
        %s536 = scalar_lea.vmem %s0, %s535
        %s537 = smul.u32 2, %s30
        %s538 = smul.u32 2, %s30
        %p539 = scmp.lt.s32.totalorder %s538, 3
        %s540 = scalar_select %p539, %s538, 3
        %s541 = smul.addr %s540, 8
        %s542 = scalar_lea.vmem %s1, %s541
        %s543 = smul.u32 2, %s30
        %s544 = smul.u32 2, %s30
        %v545 = vld [vmem:[%s536] sm:$0xff]
        %v546 = vld [vmem:[%s536 + $0x8] sm:$0xff]
        %v547 = vld [vmem:[%s542] sm:$0xff]
        %v548 = vld [vmem:[%s542 + $0x8] sm:$0xff]
        %549 = vadd.xlane.f32.xlu0 %v545
        %v550 = vpop.xlane.xlu0 %549
        %551 = vadd.xlane.f32.xlu0 %v546
        %v552 = vpop.xlane.xlu0 %551
        %v553 = vrcp.pop 128.0
        %v554 = vmul.f32 %v550, %v553
        %v555 = vmul.f32 %v552, %v553
        %556 = vadd.xlane.f32.xlu0 %v547
        %v557 = vpop.xlane.xlu0 %556
        %558 = vadd.xlane.f32.xlu0 %v548
        %v559 = vpop.xlane.xlu0 %558
        %v560 = vmul.f32 %v557, %v553
        %v561 = vmul.f32 %v559, %v553
        %vm562 = vcmask 7168
        %v563 = vsel %vm562, %v554, %v555
        %v564 = vsel %vm562, %v560, %v561
        %v565 = vld [vmem:[%s7] sm:$0xff]
        %v566 = vld [vmem:[%s8] sm:$0xff]
        %vm567 = vcmask 64512
        %v569 = vsel %vm567, %v566, 0
        %571 = vmatprep.subr.mxu0 0.0
        %572 = vmatpush1.msra.mxu0 %v564
        %573 = vmatprep.subr.mxu0 0.0
        %574 = vmatpush1.msra.mxu0 0.0
        %575 = vmatprep.subr.mxu0 0.0
        %576 = vmatpush1.msra.mxu0 0.0
        %577 = vmatprep.subr.mxu0 0.0
        %578 = vmatpush1.msra.mxu0 0.0
        %579 = vmatprep.subr.mxu0 0.0
        %580 = vmatpush1.msra.mxu0 0.0
        %581 = vmatprep.subr.mxu0 0.0
        %582 = vmatpush1.msra.mxu0 0.0
        %583 = vmatprep.subr.mxu0 0.0
        %584 = vmatpush1.msra.mxu0 0.0
        %585 = vmatprep.subr.mxu0 0.0
        %586 = vmatpush1.msra.mxu0 0.0
        %587 = vmatprep.subr.mxu0 0.0
        %588 = vmatpush1.msra.mxu0 0.0
        %589 = vmatprep.subr.mxu0 0.0
        %590 = vmatpush1.msra.mxu0 0.0
        %591 = vmatprep.subr.mxu0 0.0
        %592 = vmatpush1.msra.mxu0 0.0
        %593 = vmatprep.subr.mxu0 0.0
        %594 = vmatpush1.msra.mxu0 0.0
        %595 = vmatprep.subr.mxu0 0.0
        %596 = vmatpush1.msra.mxu0 0.0
        %597 = vmatprep.subr.mxu0 0.0
        %598 = vmatpush1.msra.mxu0 0.0
        %599 = vmatprep.subr.mxu0 0.0
        %600 = vmatpush1.msra.mxu0 0.0
        %601 = vmatprep.subr.mxu0 0.0
        %602 = vmatpush1.msra.mxu0 0.0
        %603 = vmatprep.subr.mxu0 0.0
        %604 = vmatpush1.msra.mxu0 0.0
        %605 = vmatprep.subr.mxu0 0.0
        %606 = vmatpush1.msra.mxu0 0.0
        %607 = vmatprep.subr.mxu0 0.0
        %608 = vmatpush1.msra.mxu0 0.0
        %609 = vmatprep.subr.mxu0 0.0
        %610 = vmatpush1.msra.mxu0 0.0
        %611 = vmatprep.subr.mxu0 0.0
        %612 = vmatpush1.msra.mxu0 0.0
        %613 = vmatprep.subr.mxu0 0.0
        %614 = vmatpush1.msra.mxu0 0.0
        %615 = vmatprep.subr.mxu0 0.0
        %616 = vmatpush1.msra.mxu0 0.0
        %617 = vmatprep.subr.mxu0 0.0
        %618 = vmatpush1.msra.mxu0 0.0
        %619 = vmatprep.subr.mxu0 0.0
        %620 = vmatpush1.msra.mxu0 0.0
        %621 = vmatprep.subr.mxu0 0.0
        %622 = vmatpush1.msra.mxu0 0.0
        %623 = vmatprep.subr.mxu0 0.0
        %624 = vmatpush1.msra.mxu0 0.0
        %625 = vmatprep.subr.mxu0 0.0
        %626 = vmatpush1.msra.mxu0 0.0
        %627 = vmatprep.subr.mxu0 0.0
        %628 = vmatpush1.msra.mxu0 0.0
        %629 = vmatprep.subr.mxu0 0.0
        %630 = vmatpush1.msra.mxu0 0.0
        %631 = vmatprep.subr.mxu0 0.0
        %632 = vmatpush1.msra.mxu0 0.0
        %633 = vmatprep.subr.mxu0 0.0
        %634 = vmatpush1.msra.mxu0 0.0
        %635 = vmatprep.mubr.f32.mxu0 0.0
        %636 = vmatmul.mubr.f32.gmra.mrb[0].mxu0 %v569
        %v637 = vpop.f32.mrb[0].mxu0
        %v638 = vadd.f32 0.0, %v637
        %v639 = vpop.f32.mrb[0].mxu0
        %640 = vdwg.mxu0
        %v642 = vsel %vm567, %v565, 0
        %644 = vmatprep.subr.mxu0 0.0
        %645 = vmatpush1.msra.mxu0 %v563
        %646 = vmatprep.subr.mxu0 0.0
        %647 = vmatpush1.msra.mxu0 0.0
        %648 = vmatprep.subr.mxu0 0.0
        %649 = vmatpush1.msra.mxu0 0.0
        %650 = vmatprep.subr.mxu0 0.0
        %651 = vmatpush1.msra.mxu0 0.0
        %652 = vmatprep.subr.mxu0 0.0
        %653 = vmatpush1.msra.mxu0 0.0
        %654 = vmatprep.subr.mxu0 0.0
        %655 = vmatpush1.msra.mxu0 0.0
        %656 = vmatprep.subr.mxu0 0.0
        %657 = vmatpush1.msra.mxu0 0.0
        %658 = vmatprep.subr.mxu0 0.0
        %659 = vmatpush1.msra.mxu0 0.0
        %660 = vmatprep.subr.mxu0 0.0
        %661 = vmatpush1.msra.mxu0 0.0
        %662 = vmatprep.subr.mxu0 0.0
        %663 = vmatpush1.msra.mxu0 0.0
        %664 = vmatprep.subr.mxu0 0.0
        %665 = vmatpush1.msra.mxu0 0.0
        %666 = vmatprep.subr.mxu0 0.0
        %667 = vmatpush1.msra.mxu0 0.0
        %668 = vmatprep.subr.mxu0 0.0
        %669 = vmatpush1.msra.mxu0 0.0
        %670 = vmatprep.subr.mxu0 0.0
        %671 = vmatpush1.msra.mxu0 0.0
        %672 = vmatprep.subr.mxu0 0.0
        %673 = vmatpush1.msra.mxu0 0.0
        %674 = vmatprep.subr.mxu0 0.0
        %675 = vmatpush1.msra.mxu0 0.0
        %676 = vmatprep.subr.mxu0 0.0
        %677 = vmatpush1.msra.mxu0 0.0
        %678 = vmatprep.subr.mxu0 0.0
        %679 = vmatpush1.msra.mxu0 0.0
        %680 = vmatprep.subr.mxu0 0.0
        %681 = vmatpush1.msra.mxu0 0.0
        %682 = vmatprep.subr.mxu0 0.0
        %683 = vmatpush1.msra.mxu0 0.0
        %684 = vmatprep.subr.mxu0 0.0
        %685 = vmatpush1.msra.mxu0 0.0
        %686 = vmatprep.subr.mxu0 0.0
        %687 = vmatpush1.msra.mxu0 0.0
        %688 = vmatprep.subr.mxu0 0.0
        %689 = vmatpush1.msra.mxu0 0.0
        %690 = vmatprep.subr.mxu0 0.0
        %691 = vmatpush1.msra.mxu0 0.0
        %692 = vmatprep.subr.mxu0 0.0
        %693 = vmatpush1.msra.mxu0 0.0
        %694 = vmatprep.subr.mxu0 0.0
        %695 = vmatpush1.msra.mxu0 0.0
        %696 = vmatprep.subr.mxu0 0.0
        %697 = vmatpush1.msra.mxu0 0.0
        %698 = vmatprep.subr.mxu0 0.0
        %699 = vmatpush1.msra.mxu0 0.0
        %700 = vmatprep.subr.mxu0 0.0
        %701 = vmatpush1.msra.mxu0 0.0
        %702 = vmatprep.subr.mxu0 0.0
        %703 = vmatpush1.msra.mxu0 0.0
        %704 = vmatprep.subr.mxu0 0.0
        %705 = vmatpush1.msra.mxu0 0.0
        %706 = vmatprep.subr.mxu0 0.0
        %707 = vmatpush1.msra.mxu0 0.0
        %708 = vmatprep.mubr.f32.mxu0 0.0
        %709 = vmatmul.mubr.f32.gmra.mrb[0].mxu0 %v642
        %v710 = vpop.f32.mrb[0].mxu0
        %v711 = vadd.f32 %v638, %v710
        %v712 = vpop.f32.mrb[0].mxu0
        %713 = vdwg.mxu0
        %v714 = vld [vmem:[%s9] sm:$0xff]
        %716 = vset.pattern.permute.xlu0 0
        %717 = vperm.xlu0 %716, %v714
        %v718 = vpop.permute.xlu0 %717
        %v720 = vadd.f32 %v711, %v718
        %v721 = vmax.f32 %v720, 0.0
        %v722 = vld [vmem:[%s10] sm:$0xff]
        %v723 = vld [vmem:[%s11] sm:$0xff]
        %725 = vset.pattern.permute.xlu0 0
        %726 = vperm.xlu0 %725, %v723
        %v727 = vpop.permute.xlu0 %726
        %v730 = vsel %vm567, %v722, 0
        %732 = vmatprep.subr.mxu0 0.0
        %733 = vmatpush1.msra.mxu0 %v721
        %734 = vmatprep.subr.mxu0 0.0
        %735 = vmatpush1.msra.mxu0 0.0
        %736 = vmatprep.subr.mxu0 0.0
        %737 = vmatpush1.msra.mxu0 0.0
        %738 = vmatprep.subr.mxu0 0.0
        %739 = vmatpush1.msra.mxu0 0.0
        %740 = vmatprep.subr.mxu0 0.0
        %741 = vmatpush1.msra.mxu0 0.0
        %742 = vmatprep.subr.mxu0 0.0
        %743 = vmatpush1.msra.mxu0 0.0
        %744 = vmatprep.subr.mxu0 0.0
        %745 = vmatpush1.msra.mxu0 0.0
        %746 = vmatprep.subr.mxu0 0.0
        %747 = vmatpush1.msra.mxu0 0.0
        %748 = vmatprep.subr.mxu0 0.0
        %749 = vmatpush1.msra.mxu0 0.0
        %750 = vmatprep.subr.mxu0 0.0
        %751 = vmatpush1.msra.mxu0 0.0
        %752 = vmatprep.subr.mxu0 0.0
        %753 = vmatpush1.msra.mxu0 0.0
        %754 = vmatprep.subr.mxu0 0.0
        %755 = vmatpush1.msra.mxu0 0.0
        %756 = vmatprep.subr.mxu0 0.0
        %757 = vmatpush1.msra.mxu0 0.0
        %758 = vmatprep.subr.mxu0 0.0
        %759 = vmatpush1.msra.mxu0 0.0
        %760 = vmatprep.subr.mxu0 0.0
        %761 = vmatpush1.msra.mxu0 0.0
        %762 = vmatprep.subr.mxu0 0.0
        %763 = vmatpush1.msra.mxu0 0.0
        %764 = vmatprep.subr.mxu0 0.0
        %765 = vmatpush1.msra.mxu0 0.0
        %766 = vmatprep.subr.mxu0 0.0
        %767 = vmatpush1.msra.mxu0 0.0
        %768 = vmatprep.subr.mxu0 0.0
        %769 = vmatpush1.msra.mxu0 0.0
        %770 = vmatprep.subr.mxu0 0.0
        %771 = vmatpush1.msra.mxu0 0.0
        %772 = vmatprep.subr.mxu0 0.0
        %773 = vmatpush1.msra.mxu0 0.0
        %774 = vmatprep.subr.mxu0 0.0
        %775 = vmatpush1.msra.mxu0 0.0
        %776 = vmatprep.subr.mxu0 0.0
        %777 = vmatpush1.msra.mxu0 0.0
        %778 = vmatprep.subr.mxu0 0.0
        %779 = vmatpush1.msra.mxu0 0.0
        %780 = vmatprep.subr.mxu0 0.0
        %781 = vmatpush1.msra.mxu0 0.0
        %782 = vmatprep.subr.mxu0 0.0
        %783 = vmatpush1.msra.mxu0 0.0
        %784 = vmatprep.subr.mxu0 0.0
        %785 = vmatpush1.msra.mxu0 0.0
        %786 = vmatprep.subr.mxu0 0.0
        %787 = vmatpush1.msra.mxu0 0.0
        %788 = vmatprep.subr.mxu0 0.0
        %789 = vmatpush1.msra.mxu0 0.0
        %790 = vmatprep.subr.mxu0 0.0
        %791 = vmatpush1.msra.mxu0 0.0
        %792 = vmatprep.subr.mxu0 0.0
        %793 = vmatpush1.msra.mxu0 0.0
        %794 = vmatprep.subr.mxu0 0.0
        %795 = vmatpush1.msra.mxu0 0.0
        %796 = vmatprep.mubr.f32.mxu0 0.0
        %797 = vmatmul.mubr.f32.gmra.mrb[0].mxu0 %v730
        %v798 = vpop.f32.mrb[0].mxu0
        %v799 = vadd.f32 %v727, %v798
        %v800 = vpop.f32.mrb[0].mxu0
        %801 = vdwg.mxu0
        %v802 = vld [vmem:[%s2] sm:$0xff]
        %v803 = vld [vmem:[%s3] sm:$0xff]
        %v804 = vld [vmem:[%s5] sm:$0xff]
        %v805 = vld [vmem:[%s14] sm:$0xff]
        %v806 = vld [vmem:[%s14 + $0x8] sm:$0xff]
        %v807 = vld [vmem:[%s4] sm:$0xff]
        %809 = vset.pattern.permute.xlu0 0
        %810 = vperm.xlu0 %809, %v807
        %v811 = vpop.permute.xlu0 %810
        %v813 = vld [vmem:[%s6] sm:$0xff]
        %815 = vset.pattern.permute.xlu0 0
        %816 = vperm.xlu0 %815, %v813
        %v817 = vpop.permute.xlu0 %816
        %v819 = vld [vmem:[%s13] sm:$0xff]
        %821 = vset.pattern.permute.xlu0 0
        %822 = vperm.xlu0 %821, %v819
        %v823 = vpop.permute.xlu0 %822
        %v825 = vld [vmem:[%s15] sm:$0xff]
        %v826 = vld [vmem:[%s15 + $0x8] sm:$0xff]
        %828 = vset.pattern.permute.xlu0 0
        %829 = vperm.xlu0 %828, %v825
        %v830 = vpop.permute.xlu0 %829
        %833 = vset.pattern.permute.xlu0 0
        %834 = vperm.xlu0 %833, %v826
        %v835 = vpop.permute.xlu0 %834
        %v837 = vld [vmem:[%s12] sm:$0xff]
        %v838 = vlaneseq
        %v839 = vand.u32 %v838, 127
        %vm840 = vcmp.ge.s32.totalorder %v839, 1
        %vm841 = vcmp.le.s32.totalorder %v839, 126
        %v843 = vsel %vm567, %v803, 0
        %845 = vmatprep.subr.mxu0 0.0
        %846 = vmatpush1.msra.mxu0 %v547
        %847 = vmatprep.subr.mxu0 0.0
        %848 = vmatpush1.msra.mxu0 0.0
        %849 = vmatprep.subr.mxu0 0.0
        %850 = vmatpush1.msra.mxu0 0.0
        %851 = vmatprep.subr.mxu0 0.0
        %852 = vmatpush1.msra.mxu0 0.0
        %853 = vmatprep.subr.mxu0 0.0
        %854 = vmatpush1.msra.mxu0 0.0
        %855 = vmatprep.subr.mxu0 0.0
        %856 = vmatpush1.msra.mxu0 0.0
        %857 = vmatprep.subr.mxu0 0.0
        %858 = vmatpush1.msra.mxu0 0.0
        %859 = vmatprep.subr.mxu0 0.0
        %860 = vmatpush1.msra.mxu0 0.0
        %861 = vmatprep.subr.mxu0 0.0
        %862 = vmatpush1.msra.mxu0 0.0
        %863 = vmatprep.subr.mxu0 0.0
        %864 = vmatpush1.msra.mxu0 0.0
        %865 = vmatprep.subr.mxu0 0.0
        %866 = vmatpush1.msra.mxu0 0.0
        %867 = vmatprep.subr.mxu0 0.0
        %868 = vmatpush1.msra.mxu0 0.0
        %869 = vmatprep.subr.mxu0 0.0
        %870 = vmatpush1.msra.mxu0 0.0
        %871 = vmatprep.subr.mxu0 0.0
        %872 = vmatpush1.msra.mxu0 0.0
        %873 = vmatprep.subr.mxu0 0.0
        %874 = vmatpush1.msra.mxu0 0.0
        %875 = vmatprep.subr.mxu0 0.0
        %876 = vmatpush1.msra.mxu0 0.0
        %877 = vmatprep.subr.mxu0 0.0
        %878 = vmatpush1.msra.mxu0 0.0
        %879 = vmatprep.subr.mxu0 0.0
        %880 = vmatpush1.msra.mxu0 0.0
        %881 = vmatprep.subr.mxu0 0.0
        %882 = vmatpush1.msra.mxu0 0.0
        %883 = vmatprep.subr.mxu0 0.0
        %884 = vmatpush1.msra.mxu0 0.0
        %885 = vmatprep.subr.mxu0 0.0
        %886 = vmatpush1.msra.mxu0 0.0
        %887 = vmatprep.subr.mxu0 0.0
        %888 = vmatpush1.msra.mxu0 0.0
        %889 = vmatprep.subr.mxu0 0.0
        %890 = vmatpush1.msra.mxu0 0.0
        %891 = vmatprep.subr.mxu0 0.0
        %892 = vmatpush1.msra.mxu0 0.0
        %893 = vmatprep.subr.mxu0 0.0
        %894 = vmatpush1.msra.mxu0 0.0
        %895 = vmatprep.subr.mxu0 0.0
        %896 = vmatpush1.msra.mxu0 0.0
        %897 = vmatprep.subr.mxu0 0.0
        %898 = vmatpush1.msra.mxu0 0.0
        %899 = vmatprep.subr.mxu0 0.0
        %900 = vmatpush1.msra.mxu0 0.0
        %901 = vmatprep.subr.mxu0 0.0
        %902 = vmatpush1.msra.mxu0 0.0
        %903 = vmatprep.subr.mxu0 0.0
        %904 = vmatpush1.msra.mxu0 0.0
        %905 = vmatprep.subr.mxu0 0.0
        %906 = vmatpush1.msra.mxu0 0.0
        %907 = vmatprep.subr.mxu0 0.0
        %908 = vmatpush1.msra.mxu0 0.0
        %909 = vmatprep.mubr.f32.mxu0 0.0
        %910 = vmatmul.mubr.f32.gmra.mrb[0].mxu0 %v843
        %v911 = vpop.f32.mrb[0].mxu0
        %v912 = vadd.f32 0.0, %v911
        %v913 = vpop.f32.mrb[0].mxu0
        %914 = vdwg.mxu0
        %v916 = vsel %vm567, %v802, 0
        %918 = vmatprep.subr.mxu0 0.0
        %919 = vmatpush1.msra.mxu0 %v545
        %920 = vmatprep.subr.mxu0 0.0
        %921 = vmatpush1.msra.mxu0 0.0
        %922 = vmatprep.subr.mxu0 0.0
        %923 = vmatpush1.msra.mxu0 0.0
        %924 = vmatprep.subr.mxu0 0.0
        %925 = vmatpush1.msra.mxu0 0.0
        %926 = vmatprep.subr.mxu0 0.0
        %927 = vmatpush1.msra.mxu0 0.0
        %928 = vmatprep.subr.mxu0 0.0
        %929 = vmatpush1.msra.mxu0 0.0
        %930 = vmatprep.subr.mxu0 0.0
        %931 = vmatpush1.msra.mxu0 0.0
        %932 = vmatprep.subr.mxu0 0.0
        %933 = vmatpush1.msra.mxu0 0.0
        %934 = vmatprep.subr.mxu0 0.0
        %935 = vmatpush1.msra.mxu0 0.0
        %936 = vmatprep.subr.mxu0 0.0
        %937 = vmatpush1.msra.mxu0 0.0
        %938 = vmatprep.subr.mxu0 0.0
        %939 = vmatpush1.msra.mxu0 0.0
        %940 = vmatprep.subr.mxu0 0.0
        %941 = vmatpush1.msra.mxu0 0.0
        %942 = vmatprep.subr.mxu0 0.0
        %943 = vmatpush1.msra.mxu0 0.0
        %944 = vmatprep.subr.mxu0 0.0
        %945 = vmatpush1.msra.mxu0 0.0
        %946 = vmatprep.subr.mxu0 0.0
        %947 = vmatpush1.msra.mxu0 0.0
        %948 = vmatprep.subr.mxu0 0.0
        %949 = vmatpush1.msra.mxu0 0.0
        %950 = vmatprep.subr.mxu0 0.0
        %951 = vmatpush1.msra.mxu0 0.0
        %952 = vmatprep.subr.mxu0 0.0
        %953 = vmatpush1.msra.mxu0 0.0
        %954 = vmatprep.subr.mxu0 0.0
        %955 = vmatpush1.msra.mxu0 0.0
        %956 = vmatprep.subr.mxu0 0.0
        %957 = vmatpush1.msra.mxu0 0.0
        %958 = vmatprep.subr.mxu0 0.0
        %959 = vmatpush1.msra.mxu0 0.0
        %960 = vmatprep.subr.mxu0 0.0
        %961 = vmatpush1.msra.mxu0 0.0
        %962 = vmatprep.subr.mxu0 0.0
        %963 = vmatpush1.msra.mxu0 0.0
        %964 = vmatprep.subr.mxu0 0.0
        %965 = vmatpush1.msra.mxu0 0.0
        %966 = vmatprep.subr.mxu0 0.0
        %967 = vmatpush1.msra.mxu0 0.0
        %968 = vmatprep.subr.mxu0 0.0
        %969 = vmatpush1.msra.mxu0 0.0
        %970 = vmatprep.subr.mxu0 0.0
        %971 = vmatpush1.msra.mxu0 0.0
        %972 = vmatprep.subr.mxu0 0.0
        %973 = vmatpush1.msra.mxu0 0.0
        %974 = vmatprep.subr.mxu0 0.0
        %975 = vmatpush1.msra.mxu0 0.0
        %976 = vmatprep.subr.mxu0 0.0
        %977 = vmatpush1.msra.mxu0 0.0
        %978 = vmatprep.subr.mxu0 0.0
        %979 = vmatpush1.msra.mxu0 0.0
        %980 = vmatprep.subr.mxu0 0.0
        %981 = vmatpush1.msra.mxu0 0.0
        %982 = vmatprep.mubr.f32.mxu0 0.0
        %983 = vmatmul.mubr.f32.gmra.mrb[0].mxu0 %v916
        %v984 = vpop.f32.mrb[0].mxu0
        %v985 = vadd.f32 %v912, %v984
        %v986 = vpop.f32.mrb[0].mxu0
        %987 = vdwg.mxu0
        %v988 = vadd.f32 %v985, %v811
        %v989 = vmax.f32 %v988, 0.0
        %v991 = vsel %vm567, %v804, 0
        %993 = vmatprep.subr.mxu0 0.0
        %994 = vmatpush1.msra.mxu0 %v989
        %995 = vmatprep.subr.mxu0 0.0
        %996 = vmatpush1.msra.mxu0 0.0
        %997 = vmatprep.subr.mxu0 0.0
        %998 = vmatpush1.msra.mxu0 0.0
        %999 = vmatprep.subr.mxu0 0.0
        %1000 = vmatpush1.msra.mxu0 0.0
        %1001 = vmatprep.subr.mxu0 0.0
        %1002 = vmatpush1.msra.mxu0 0.0
        %1003 = vmatprep.subr.mxu0 0.0
        %1004 = vmatpush1.msra.mxu0 0.0
        %1005 = vmatprep.subr.mxu0 0.0
        %1006 = vmatpush1.msra.mxu0 0.0
        %1007 = vmatprep.subr.mxu0 0.0
        %1008 = vmatpush1.msra.mxu0 0.0
        %1009 = vmatprep.subr.mxu0 0.0
        %1010 = vmatpush1.msra.mxu0 0.0
        %1011 = vmatprep.subr.mxu0 0.0
        %1012 = vmatpush1.msra.mxu0 0.0
        %1013 = vmatprep.subr.mxu0 0.0
        %1014 = vmatpush1.msra.mxu0 0.0
        %1015 = vmatprep.subr.mxu0 0.0
        %1016 = vmatpush1.msra.mxu0 0.0
        %1017 = vmatprep.subr.mxu0 0.0
        %1018 = vmatpush1.msra.mxu0 0.0
        %1019 = vmatprep.subr.mxu0 0.0
        %1020 = vmatpush1.msra.mxu0 0.0
        %1021 = vmatprep.subr.mxu0 0.0
        %1022 = vmatpush1.msra.mxu0 0.0
        %1023 = vmatprep.subr.mxu0 0.0
        %1024 = vmatpush1.msra.mxu0 0.0
        %1025 = vmatprep.subr.mxu0 0.0
        %1026 = vmatpush1.msra.mxu0 0.0
        %1027 = vmatprep.subr.mxu0 0.0
        %1028 = vmatpush1.msra.mxu0 0.0
        %1029 = vmatprep.subr.mxu0 0.0
        %1030 = vmatpush1.msra.mxu0 0.0
        %1031 = vmatprep.subr.mxu0 0.0
        %1032 = vmatpush1.msra.mxu0 0.0
        %1033 = vmatprep.subr.mxu0 0.0
        %1034 = vmatpush1.msra.mxu0 0.0
        %1035 = vmatprep.subr.mxu0 0.0
        %1036 = vmatpush1.msra.mxu0 0.0
        %1037 = vmatprep.subr.mxu0 0.0
        %1038 = vmatpush1.msra.mxu0 0.0
        %1039 = vmatprep.subr.mxu0 0.0
        %1040 = vmatpush1.msra.mxu0 0.0
        %1041 = vmatprep.subr.mxu0 0.0
        %1042 = vmatpush1.msra.mxu0 0.0
        %1043 = vmatprep.subr.mxu0 0.0
        %1044 = vmatpush1.msra.mxu0 0.0
        %1045 = vmatprep.subr.mxu0 0.0
        %1046 = vmatpush1.msra.mxu0 0.0
        %1047 = vmatprep.subr.mxu0 0.0
        %1048 = vmatpush1.msra.mxu0 0.0
        %1049 = vmatprep.subr.mxu0 0.0
        %1050 = vmatpush1.msra.mxu0 0.0
        %1051 = vmatprep.subr.mxu0 0.0
        %1052 = vmatpush1.msra.mxu0 0.0
        %1053 = vmatprep.subr.mxu0 0.0
        %1054 = vmatpush1.msra.mxu0 0.0
        %1055 = vmatprep.subr.mxu0 0.0
        %1056 = vmatpush1.msra.mxu0 0.0
        %1057 = vmatprep.mubr.f32.mxu0 0.0
        %1058 = vmatmul.mubr.f32.gmra.mrb[0].mxu0 %v991
        %v1059 = vpop.f32.mrb[0].mxu0
        %v1060 = vadd.f32 %v817, %v1059
        %v1061 = vpop.f32.mrb[0].mxu0
        %1062 = vdwg.mxu0
        %v1063 = vrot.slane %v545, 4
        %v1064 = vmax.f32 %v545, %v1063
        %v1065 = vrot.slane %v1064, 2
        %v1066 = vmax.f32 %v1064, %v1065
        %v1067 = vrot.slane %v1066, 1
        %v1068 = vmax.f32 %v1066, %v1067
        %v1069 = vrot.slane %v547, 4
        %v1070 = vmax.f32 %v547, %v1069
        %v1071 = vrot.slane %v1070, 2
        %v1072 = vmax.f32 %v1070, %v1071
        %v1073 = vrot.slane %v1072, 1
        %v1074 = vmax.f32 %v1072, %v1073
        %v1075 = vmax.f32 %v1068, %v1074
        %v1076 = vrot.slane %v545, 4
        %v1077 = vadd.f32 %v545, %v1076
        %v1078 = vrot.slane %v1077, 2
        %v1079 = vadd.f32 %v1077, %v1078
        %v1080 = vrot.slane %v1079, 1
        %v1081 = vadd.f32 %v1079, %v1080
        %v1082 = vrot.slane %v547, 4
        %v1083 = vadd.f32 %v547, %v1082
        %v1084 = vrot.slane %v1083, 2
        %v1085 = vadd.f32 %v1083, %v1084
        %v1086 = vrot.slane %v1085, 1
        %v1087 = vadd.f32 %v1085, %v1086
        %v1088 = vadd.f32 %v1081, %v1087
        %v1089 = vmul.f32 %v1088, 0.0625
        %1090 = vrot.lane.b32.xlu0 %v1075, 1
        %v1091 = vpop.permute.xlu0 %1090
        %v1092 = vsel %vm840, %v1091, 0.0
        %1093 = vrot.lane.b32.xlu0 %v1075, 127
        %v1094 = vpop.permute.xlu0 %1093
        %v1095 = vsel %vm841, %v1094, 0.0
        %1096 = vrot.lane.b32.xlu0 %v1089, 1
        %v1097 = vpop.permute.xlu0 %1096
        %v1098 = vsel %vm840, %v1097, 0.0
        %1099 = vrot.lane.b32.xlu0 %v1089, 127
        %v1100 = vpop.permute.xlu0 %1099
        %v1101 = vsel %vm841, %v1100, 0.0
        %1103 = vset.pattern.permute.xlu0 0
        %1104 = vperm.xlu0 %1103, %v837
        %v1105 = vpop.permute.xlu0 %1104
        %v1107 = vlaneseq
        %v1108 = vshrl.u32 %v1107, 7
        %v1109 = vsub.s32 0, %v1108
        %v1110 = vrot.slane %v1092, %v1109
        %v1111 = vmul.f32 %v1105, %v1110
        %1112 = vset.pattern.permute.xlu0 1
        %1113 = vperm.xlu0 %1112, %v837
        %v1114 = vpop.permute.xlu0 %1113
        %v1116 = vmul.f32 %v1114, %v1075
        %v1117 = vadd.f32 %v1111, %v1116
        %1118 = vset.pattern.permute.xlu0 2
        %1119 = vperm.xlu0 %1118, %v837
        %v1120 = vpop.permute.xlu0 %1119
        %v1122 = vlaneseq
        %v1123 = vshrl.u32 %v1122, 7
        %v1124 = vsub.s32 0, %v1123
        %v1125 = vrot.slane %v1095, %v1124
        %v1126 = vmul.f32 %v1120, %v1125
        %v1127 = vadd.f32 %v1117, %v1126
        %1128 = vset.pattern.permute.xlu0 3
        %1129 = vperm.xlu0 %1128, %v837
        %v1130 = vpop.permute.xlu0 %1129
        %v1132 = vlaneseq
        %v1133 = vshrl.u32 %v1132, 7
        %v1134 = vsub.s32 0, %v1133
        %v1135 = vrot.slane %v1098, %v1134
        %v1136 = vmul.f32 %v1130, %v1135
        %v1137 = vadd.f32 %v1127, %v1136
        %1138 = vset.pattern.permute.xlu0 4
        %1139 = vperm.xlu0 %1138, %v837
        %v1140 = vpop.permute.xlu0 %1139
        %v1142 = vmul.f32 %v1140, %v1089
        %v1143 = vadd.f32 %v1137, %v1142
        %1144 = vset.pattern.permute.xlu0 5
        %1145 = vperm.xlu0 %1144, %v837
        %v1146 = vpop.permute.xlu0 %1145
        %v1148 = vlaneseq
        %v1149 = vshrl.u32 %v1148, 7
        %v1150 = vsub.s32 0, %v1149
        %v1151 = vrot.slane %v1101, %v1150
        %v1152 = vmul.f32 %v1146, %v1151
        %v1153 = vadd.f32 %v1143, %v1152
        %v1154 = vadd.f32 %v1153, %v823
        %1156 = vset.pattern.permute.xlu0 0
        %1157 = vperm.xlu0 %1156, %v799
        %v1158 = vpop.permute.xlu0 %1157
        %v1160 = vadd.f32 %v1060, %v1158
        %v1161 = vadd.f32 %v1160, %v1154
        %v1163 = vsel %vm567, %v805, 0
        %v1166 = vsel %vm567, %v806, 0
        %1168 = vmatprep.subr.mxu0 0.0
        %1169 = vmatpush1.msra.mxu0 %v1161
        %1170 = vmatprep.subr.mxu0 0.0
        %1171 = vmatpush1.msra.mxu0 0.0
        %1172 = vmatprep.subr.mxu0 0.0
        %1173 = vmatpush1.msra.mxu0 0.0
        %1174 = vmatprep.subr.mxu0 0.0
        %1175 = vmatpush1.msra.mxu0 0.0
        %1176 = vmatprep.subr.mxu0 0.0
        %1177 = vmatpush1.msra.mxu0 0.0
        %1178 = vmatprep.subr.mxu0 0.0
        %1179 = vmatpush1.msra.mxu0 0.0
        %1180 = vmatprep.subr.mxu0 0.0
        %1181 = vmatpush1.msra.mxu0 0.0
        %1182 = vmatprep.subr.mxu0 0.0
        %1183 = vmatpush1.msra.mxu0 0.0
        %1184 = vmatprep.subr.mxu0 0.0
        %1185 = vmatpush1.msra.mxu0 0.0
        %1186 = vmatprep.subr.mxu0 0.0
        %1187 = vmatpush1.msra.mxu0 0.0
        %1188 = vmatprep.subr.mxu0 0.0
        %1189 = vmatpush1.msra.mxu0 0.0
        %1190 = vmatprep.subr.mxu0 0.0
        %1191 = vmatpush1.msra.mxu0 0.0
        %1192 = vmatprep.subr.mxu0 0.0
        %1193 = vmatpush1.msra.mxu0 0.0
        %1194 = vmatprep.subr.mxu0 0.0
        %1195 = vmatpush1.msra.mxu0 0.0
        %1196 = vmatprep.subr.mxu0 0.0
        %1197 = vmatpush1.msra.mxu0 0.0
        %1198 = vmatprep.subr.mxu0 0.0
        %1199 = vmatpush1.msra.mxu0 0.0
        %1200 = vmatprep.subr.mxu0 0.0
        %1201 = vmatpush1.msra.mxu0 0.0
        %1202 = vmatprep.subr.mxu0 0.0
        %1203 = vmatpush1.msra.mxu0 0.0
        %1204 = vmatprep.subr.mxu0 0.0
        %1205 = vmatpush1.msra.mxu0 0.0
        %1206 = vmatprep.subr.mxu0 0.0
        %1207 = vmatpush1.msra.mxu0 0.0
        %1208 = vmatprep.subr.mxu0 0.0
        %1209 = vmatpush1.msra.mxu0 0.0
        %1210 = vmatprep.subr.mxu0 0.0
        %1211 = vmatpush1.msra.mxu0 0.0
        %1212 = vmatprep.subr.mxu0 0.0
        %1213 = vmatpush1.msra.mxu0 0.0
        %1214 = vmatprep.subr.mxu0 0.0
        %1215 = vmatpush1.msra.mxu0 0.0
        %1216 = vmatprep.subr.mxu0 0.0
        %1217 = vmatpush1.msra.mxu0 0.0
        %1218 = vmatprep.subr.mxu0 0.0
        %1219 = vmatpush1.msra.mxu0 0.0
        %1220 = vmatprep.subr.mxu0 0.0
        %1221 = vmatpush1.msra.mxu0 0.0
        %1222 = vmatprep.subr.mxu0 0.0
        %1223 = vmatpush1.msra.mxu0 0.0
        %1224 = vmatprep.subr.mxu0 0.0
        %1225 = vmatpush1.msra.mxu0 0.0
        %1226 = vmatprep.subr.mxu0 0.0
        %1227 = vmatpush1.msra.mxu0 0.0
        %1228 = vmatprep.subr.mxu0 0.0
        %1229 = vmatpush1.msra.mxu0 0.0
        %1230 = vmatprep.subr.mxu0 0.0
        %1231 = vmatpush1.msra.mxu0 0.0
        %1232 = vmatprep.mubr.f32.mxu0 0.0
        %1233 = vmatmul.mubr.f32.gmra.mrb[0].mxu0 %v1163
        %v1234 = vpop.f32.mrb[0].mxu0
        %v1235 = vadd.f32 %v830, %v1234
        %v1236 = vpop.f32.mrb[0].mxu0
        %1237 = vmatprep.mubr.f32.mxu0 0.0
        %1238 = vmatmul.mubr.f32.gmra.mrb[0].mxu0 %v1166
        %v1239 = vpop.f32.mrb[0].mxu0
        %v1240 = vadd.f32 %v835, %v1239
        %v1241 = vpop.f32.mrb[0].mxu0
        %1242 = vdwg.mxu0
        %v1243 = vxor.u32 %v1235, 2147483648
        %v1244 = vxor.u32 %v1240, 2147483648
        %v1245 = vmul.f32 %v1243, 1.442695
        %v1246 = vpow.pop %v1245
        %v1247 = vmul.f32 %v1244, 1.442695
        %v1248 = vpow.pop %v1247
        %v1249 = vadd.f32 %v1246, 1.0
        %v1250 = vadd.f32 %v1248, 1.0
        %v1251 = vrcp.pop %v1249
        %v1252 = vmul.f32 1.0, %v1251
        %v1253 = vrcp.pop %v1250
        %v1254 = vmul.f32 1.0, %v1253
        %v1255 = vmul.f32 %v545, %v1252
        %v1256 = vmul.f32 %v547, %v1254
        %v1257 = vadd.f32 %v1255, %v1256
        %1258 = vst [vmem:[%s531] sm:$0xff] %v1257
        %1259 = vmatprep.subr.mxu0 0.0
        %1260 = vmatpush1.msra.mxu0 %v548
        %1261 = vmatprep.subr.mxu0 0.0
        %1262 = vmatpush1.msra.mxu0 0.0
        %1263 = vmatprep.subr.mxu0 0.0
        %1264 = vmatpush1.msra.mxu0 0.0
        %1265 = vmatprep.subr.mxu0 0.0
        %1266 = vmatpush1.msra.mxu0 0.0
        %1267 = vmatprep.subr.mxu0 0.0
        %1268 = vmatpush1.msra.mxu0 0.0
        %1269 = vmatprep.subr.mxu0 0.0
        %1270 = vmatpush1.msra.mxu0 0.0
        %1271 = vmatprep.subr.mxu0 0.0
        %1272 = vmatpush1.msra.mxu0 0.0
        %1273 = vmatprep.subr.mxu0 0.0
        %1274 = vmatpush1.msra.mxu0 0.0
        %1275 = vmatprep.subr.mxu0 0.0
        %1276 = vmatpush1.msra.mxu0 0.0
        %1277 = vmatprep.subr.mxu0 0.0
        %1278 = vmatpush1.msra.mxu0 0.0
        %1279 = vmatprep.subr.mxu0 0.0
        %1280 = vmatpush1.msra.mxu0 0.0
        %1281 = vmatprep.subr.mxu0 0.0
        %1282 = vmatpush1.msra.mxu0 0.0
        %1283 = vmatprep.subr.mxu0 0.0
        %1284 = vmatpush1.msra.mxu0 0.0
        %1285 = vmatprep.subr.mxu0 0.0
        %1286 = vmatpush1.msra.mxu0 0.0
        %1287 = vmatprep.subr.mxu0 0.0
        %1288 = vmatpush1.msra.mxu0 0.0
        %1289 = vmatprep.subr.mxu0 0.0
        %1290 = vmatpush1.msra.mxu0 0.0
        %1291 = vmatprep.subr.mxu0 0.0
        %1292 = vmatpush1.msra.mxu0 0.0
        %1293 = vmatprep.subr.mxu0 0.0
        %1294 = vmatpush1.msra.mxu0 0.0
        %1295 = vmatprep.subr.mxu0 0.0
        %1296 = vmatpush1.msra.mxu0 0.0
        %1297 = vmatprep.subr.mxu0 0.0
        %1298 = vmatpush1.msra.mxu0 0.0
        %1299 = vmatprep.subr.mxu0 0.0
        %1300 = vmatpush1.msra.mxu0 0.0
        %1301 = vmatprep.subr.mxu0 0.0
        %1302 = vmatpush1.msra.mxu0 0.0
        %1303 = vmatprep.subr.mxu0 0.0
        %1304 = vmatpush1.msra.mxu0 0.0
        %1305 = vmatprep.subr.mxu0 0.0
        %1306 = vmatpush1.msra.mxu0 0.0
        %1307 = vmatprep.subr.mxu0 0.0
        %1308 = vmatpush1.msra.mxu0 0.0
        %1309 = vmatprep.subr.mxu0 0.0
        %1310 = vmatpush1.msra.mxu0 0.0
        %1311 = vmatprep.subr.mxu0 0.0
        %1312 = vmatpush1.msra.mxu0 0.0
        %1313 = vmatprep.subr.mxu0 0.0
        %1314 = vmatpush1.msra.mxu0 0.0
        %1315 = vmatprep.subr.mxu0 0.0
        %1316 = vmatpush1.msra.mxu0 0.0
        %1317 = vmatprep.subr.mxu0 0.0
        %1318 = vmatpush1.msra.mxu0 0.0
        %1319 = vmatprep.subr.mxu0 0.0
        %1320 = vmatpush1.msra.mxu0 0.0
        %1321 = vmatprep.subr.mxu0 0.0
        %1322 = vmatpush1.msra.mxu0 0.0
        %1323 = vmatprep.mubr.f32.mxu0 0.0
        %1324 = vmatmul.mubr.f32.gmra.mrb[0].mxu0 %v843
        %v1325 = vpop.f32.mrb[0].mxu0
        %v1326 = vadd.f32 0.0, %v1325
        %v1327 = vpop.f32.mrb[0].mxu0
        %1328 = vdwg.mxu0
        %1329 = vmatprep.subr.mxu0 0.0
        %1330 = vmatpush1.msra.mxu0 %v546
        %1331 = vmatprep.subr.mxu0 0.0
        %1332 = vmatpush1.msra.mxu0 0.0
        %1333 = vmatprep.subr.mxu0 0.0
        %1334 = vmatpush1.msra.mxu0 0.0
        %1335 = vmatprep.subr.mxu0 0.0
        %1336 = vmatpush1.msra.mxu0 0.0
        %1337 = vmatprep.subr.mxu0 0.0
        %1338 = vmatpush1.msra.mxu0 0.0
        %1339 = vmatprep.subr.mxu0 0.0
        %1340 = vmatpush1.msra.mxu0 0.0
        %1341 = vmatprep.subr.mxu0 0.0
        %1342 = vmatpush1.msra.mxu0 0.0
        %1343 = vmatprep.subr.mxu0 0.0
        %1344 = vmatpush1.msra.mxu0 0.0
        %1345 = vmatprep.subr.mxu0 0.0
        %1346 = vmatpush1.msra.mxu0 0.0
        %1347 = vmatprep.subr.mxu0 0.0
        %1348 = vmatpush1.msra.mxu0 0.0
        %1349 = vmatprep.subr.mxu0 0.0
        %1350 = vmatpush1.msra.mxu0 0.0
        %1351 = vmatprep.subr.mxu0 0.0
        %1352 = vmatpush1.msra.mxu0 0.0
        %1353 = vmatprep.subr.mxu0 0.0
        %1354 = vmatpush1.msra.mxu0 0.0
        %1355 = vmatprep.subr.mxu0 0.0
        %1356 = vmatpush1.msra.mxu0 0.0
        %1357 = vmatprep.subr.mxu0 0.0
        %1358 = vmatpush1.msra.mxu0 0.0
        %1359 = vmatprep.subr.mxu0 0.0
        %1360 = vmatpush1.msra.mxu0 0.0
        %1361 = vmatprep.subr.mxu0 0.0
        %1362 = vmatpush1.msra.mxu0 0.0
        %1363 = vmatprep.subr.mxu0 0.0
        %1364 = vmatpush1.msra.mxu0 0.0
        %1365 = vmatprep.subr.mxu0 0.0
        %1366 = vmatpush1.msra.mxu0 0.0
        %1367 = vmatprep.subr.mxu0 0.0
        %1368 = vmatpush1.msra.mxu0 0.0
        %1369 = vmatprep.subr.mxu0 0.0
        %1370 = vmatpush1.msra.mxu0 0.0
        %1371 = vmatprep.subr.mxu0 0.0
        %1372 = vmatpush1.msra.mxu0 0.0
        %1373 = vmatprep.subr.mxu0 0.0
        %1374 = vmatpush1.msra.mxu0 0.0
        %1375 = vmatprep.subr.mxu0 0.0
        %1376 = vmatpush1.msra.mxu0 0.0
        %1377 = vmatprep.subr.mxu0 0.0
        %1378 = vmatpush1.msra.mxu0 0.0
        %1379 = vmatprep.subr.mxu0 0.0
        %1380 = vmatpush1.msra.mxu0 0.0
        %1381 = vmatprep.subr.mxu0 0.0
        %1382 = vmatpush1.msra.mxu0 0.0
        %1383 = vmatprep.subr.mxu0 0.0
        %1384 = vmatpush1.msra.mxu0 0.0
        %1385 = vmatprep.subr.mxu0 0.0
        %1386 = vmatpush1.msra.mxu0 0.0
        %1387 = vmatprep.subr.mxu0 0.0
        %1388 = vmatpush1.msra.mxu0 0.0
        %1389 = vmatprep.subr.mxu0 0.0
        %1390 = vmatpush1.msra.mxu0 0.0
        %1391 = vmatprep.subr.mxu0 0.0
        %1392 = vmatpush1.msra.mxu0 0.0
        %1393 = vmatprep.mubr.f32.mxu0 0.0
        %1394 = vmatmul.mubr.f32.gmra.mrb[0].mxu0 %v916
        %v1395 = vpop.f32.mrb[0].mxu0
        %v1396 = vadd.f32 %v1326, %v1395
        %v1397 = vpop.f32.mrb[0].mxu0
        %1398 = vdwg.mxu0
        %v1399 = vadd.f32 %v1396, %v811
        %v1400 = vmax.f32 %v1399, 0.0
        %1401 = vmatprep.subr.mxu0 0.0
        %1402 = vmatpush1.msra.mxu0 %v1400
        %1403 = vmatprep.subr.mxu0 0.0
        %1404 = vmatpush1.msra.mxu0 0.0
        %1405 = vmatprep.subr.mxu0 0.0
        %1406 = vmatpush1.msra.mxu0 0.0
        %1407 = vmatprep.subr.mxu0 0.0
        %1408 = vmatpush1.msra.mxu0 0.0
        %1409 = vmatprep.subr.mxu0 0.0
        %1410 = vmatpush1.msra.mxu0 0.0
        %1411 = vmatprep.subr.mxu0 0.0
        %1412 = vmatpush1.msra.mxu0 0.0
        %1413 = vmatprep.subr.mxu0 0.0
        %1414 = vmatpush1.msra.mxu0 0.0
        %1415 = vmatprep.subr.mxu0 0.0
        %1416 = vmatpush1.msra.mxu0 0.0
        %1417 = vmatprep.subr.mxu0 0.0
        %1418 = vmatpush1.msra.mxu0 0.0
        %1419 = vmatprep.subr.mxu0 0.0
        %1420 = vmatpush1.msra.mxu0 0.0
        %1421 = vmatprep.subr.mxu0 0.0
        %1422 = vmatpush1.msra.mxu0 0.0
        %1423 = vmatprep.subr.mxu0 0.0
        %1424 = vmatpush1.msra.mxu0 0.0
        %1425 = vmatprep.subr.mxu0 0.0
        %1426 = vmatpush1.msra.mxu0 0.0
        %1427 = vmatprep.subr.mxu0 0.0
        %1428 = vmatpush1.msra.mxu0 0.0
        %1429 = vmatprep.subr.mxu0 0.0
        %1430 = vmatpush1.msra.mxu0 0.0
        %1431 = vmatprep.subr.mxu0 0.0
        %1432 = vmatpush1.msra.mxu0 0.0
        %1433 = vmatprep.subr.mxu0 0.0
        %1434 = vmatpush1.msra.mxu0 0.0
        %1435 = vmatprep.subr.mxu0 0.0
        %1436 = vmatpush1.msra.mxu0 0.0
        %1437 = vmatprep.subr.mxu0 0.0
        %1438 = vmatpush1.msra.mxu0 0.0
        %1439 = vmatprep.subr.mxu0 0.0
        %1440 = vmatpush1.msra.mxu0 0.0
        %1441 = vmatprep.subr.mxu0 0.0
        %1442 = vmatpush1.msra.mxu0 0.0
        %1443 = vmatprep.subr.mxu0 0.0
        %1444 = vmatpush1.msra.mxu0 0.0
        %1445 = vmatprep.subr.mxu0 0.0
        %1446 = vmatpush1.msra.mxu0 0.0
        %1447 = vmatprep.subr.mxu0 0.0
        %1448 = vmatpush1.msra.mxu0 0.0
        %1449 = vmatprep.subr.mxu0 0.0
        %1450 = vmatpush1.msra.mxu0 0.0
        %1451 = vmatprep.subr.mxu0 0.0
        %1452 = vmatpush1.msra.mxu0 0.0
        %1453 = vmatprep.subr.mxu0 0.0
        %1454 = vmatpush1.msra.mxu0 0.0
        %1455 = vmatprep.subr.mxu0 0.0
        %1456 = vmatpush1.msra.mxu0 0.0
        %1457 = vmatprep.subr.mxu0 0.0
        %1458 = vmatpush1.msra.mxu0 0.0
        %1459 = vmatprep.subr.mxu0 0.0
        %1460 = vmatpush1.msra.mxu0 0.0
        %1461 = vmatprep.subr.mxu0 0.0
        %1462 = vmatpush1.msra.mxu0 0.0
        %1463 = vmatprep.subr.mxu0 0.0
        %1464 = vmatpush1.msra.mxu0 0.0
        %1465 = vmatprep.mubr.f32.mxu0 0.0
        %1466 = vmatmul.mubr.f32.gmra.mrb[0].mxu0 %v991
        %v1467 = vpop.f32.mrb[0].mxu0
        %v1468 = vadd.f32 %v817, %v1467
        %v1469 = vpop.f32.mrb[0].mxu0
        %1470 = vdwg.mxu0
        %v1471 = vrot.slane %v546, 4
        %v1472 = vmax.f32 %v546, %v1471
        %v1473 = vrot.slane %v1472, 2
        %v1474 = vmax.f32 %v1472, %v1473
        %v1475 = vrot.slane %v1474, 1
        %v1476 = vmax.f32 %v1474, %v1475
        %v1477 = vrot.slane %v548, 4
        %v1478 = vmax.f32 %v548, %v1477
        %v1479 = vrot.slane %v1478, 2
        %v1480 = vmax.f32 %v1478, %v1479
        %v1481 = vrot.slane %v1480, 1
        %v1482 = vmax.f32 %v1480, %v1481
        %v1483 = vmax.f32 %v1476, %v1482
        %v1484 = vrot.slane %v546, 4
        %v1485 = vadd.f32 %v546, %v1484
        %v1486 = vrot.slane %v1485, 2
        %v1487 = vadd.f32 %v1485, %v1486
        %v1488 = vrot.slane %v1487, 1
        %v1489 = vadd.f32 %v1487, %v1488
        %v1490 = vrot.slane %v548, 4
        %v1491 = vadd.f32 %v548, %v1490
        %v1492 = vrot.slane %v1491, 2
        %v1493 = vadd.f32 %v1491, %v1492
        %v1494 = vrot.slane %v1493, 1
        %v1495 = vadd.f32 %v1493, %v1494
        %v1496 = vadd.f32 %v1489, %v1495
        %v1497 = vmul.f32 %v1496, 0.0625
        %1498 = vrot.lane.b32.xlu0 %v1483, 1
        %v1499 = vpop.permute.xlu0 %1498
        %v1500 = vsel %vm840, %v1499, 0.0
        %1501 = vrot.lane.b32.xlu0 %v1483, 127
        %v1502 = vpop.permute.xlu0 %1501
        %v1503 = vsel %vm841, %v1502, 0.0
        %1504 = vrot.lane.b32.xlu0 %v1497, 1
        %v1505 = vpop.permute.xlu0 %1504
        %v1506 = vsel %vm840, %v1505, 0.0
        %1507 = vrot.lane.b32.xlu0 %v1497, 127
        %v1508 = vpop.permute.xlu0 %1507
        %v1509 = vsel %vm841, %v1508, 0.0
        %v1510 = vlaneseq
        %v1511 = vshrl.u32 %v1510, 7
        %v1512 = vsub.s32 0, %v1511
        %v1513 = vrot.slane %v1500, %v1512
        %v1514 = vmul.f32 %v1105, %v1513
        %v1515 = vmul.f32 %v1114, %v1483
        %v1516 = vadd.f32 %v1514, %v1515
        %v1517 = vlaneseq
        %v1518 = vshrl.u32 %v1517, 7
        %v1519 = vsub.s32 0, %v1518
        %v1520 = vrot.slane %v1503, %v1519
        %v1521 = vmul.f32 %v1120, %v1520
        %v1522 = vadd.f32 %v1516, %v1521
        %v1523 = vlaneseq
        %v1524 = vshrl.u32 %v1523, 7
        %v1525 = vsub.s32 0, %v1524
        %v1526 = vrot.slane %v1506, %v1525
        %v1527 = vmul.f32 %v1130, %v1526
        %v1528 = vadd.f32 %v1522, %v1527
        %v1529 = vmul.f32 %v1140, %v1497
        %v1530 = vadd.f32 %v1528, %v1529
        %v1531 = vlaneseq
        %v1532 = vshrl.u32 %v1531, 7
        %v1533 = vsub.s32 0, %v1532
        %v1534 = vrot.slane %v1509, %v1533
        %v1535 = vmul.f32 %v1146, %v1534
        %v1536 = vadd.f32 %v1530, %v1535
        %v1537 = vadd.f32 %v1536, %v823
        %1538 = vset.pattern.permute.xlu0 1
        %1539 = vperm.xlu0 %1538, %v799
        %v1540 = vpop.permute.xlu0 %1539
        %v1542 = vadd.f32 %v1468, %v1540
        %v1543 = vadd.f32 %v1542, %v1537
        %1544 = vmatprep.subr.mxu0 0.0
        %1545 = vmatpush1.msra.mxu0 %v1543
        %1546 = vmatprep.subr.mxu0 0.0
        %1547 = vmatpush1.msra.mxu0 0.0
        %1548 = vmatprep.subr.mxu0 0.0
        %1549 = vmatpush1.msra.mxu0 0.0
        %1550 = vmatprep.subr.mxu0 0.0
        %1551 = vmatpush1.msra.mxu0 0.0
        %1552 = vmatprep.subr.mxu0 0.0
        %1553 = vmatpush1.msra.mxu0 0.0
        %1554 = vmatprep.subr.mxu0 0.0
        %1555 = vmatpush1.msra.mxu0 0.0
        %1556 = vmatprep.subr.mxu0 0.0
        %1557 = vmatpush1.msra.mxu0 0.0
        %1558 = vmatprep.subr.mxu0 0.0
        %1559 = vmatpush1.msra.mxu0 0.0
        %1560 = vmatprep.subr.mxu0 0.0
        %1561 = vmatpush1.msra.mxu0 0.0
        %1562 = vmatprep.subr.mxu0 0.0
        %1563 = vmatpush1.msra.mxu0 0.0
        %1564 = vmatprep.subr.mxu0 0.0
        %1565 = vmatpush1.msra.mxu0 0.0
        %1566 = vmatprep.subr.mxu0 0.0
        %1567 = vmatpush1.msra.mxu0 0.0
        %1568 = vmatprep.subr.mxu0 0.0
        %1569 = vmatpush1.msra.mxu0 0.0
        %1570 = vmatprep.subr.mxu0 0.0
        %1571 = vmatpush1.msra.mxu0 0.0
        %1572 = vmatprep.subr.mxu0 0.0
        %1573 = vmatpush1.msra.mxu0 0.0
        %1574 = vmatprep.subr.mxu0 0.0
        %1575 = vmatpush1.msra.mxu0 0.0
        %1576 = vmatprep.subr.mxu0 0.0
        %1577 = vmatpush1.msra.mxu0 0.0
        %1578 = vmatprep.subr.mxu0 0.0
        %1579 = vmatpush1.msra.mxu0 0.0
        %1580 = vmatprep.subr.mxu0 0.0
        %1581 = vmatpush1.msra.mxu0 0.0
        %1582 = vmatprep.subr.mxu0 0.0
        %1583 = vmatpush1.msra.mxu0 0.0
        %1584 = vmatprep.subr.mxu0 0.0
        %1585 = vmatpush1.msra.mxu0 0.0
        %1586 = vmatprep.subr.mxu0 0.0
        %1587 = vmatpush1.msra.mxu0 0.0
        %1588 = vmatprep.subr.mxu0 0.0
        %1589 = vmatpush1.msra.mxu0 0.0
        %1590 = vmatprep.subr.mxu0 0.0
        %1591 = vmatpush1.msra.mxu0 0.0
        %1592 = vmatprep.subr.mxu0 0.0
        %1593 = vmatpush1.msra.mxu0 0.0
        %1594 = vmatprep.subr.mxu0 0.0
        %1595 = vmatpush1.msra.mxu0 0.0
        %1596 = vmatprep.subr.mxu0 0.0
        %1597 = vmatpush1.msra.mxu0 0.0
        %1598 = vmatprep.subr.mxu0 0.0
        %1599 = vmatpush1.msra.mxu0 0.0
        %1600 = vmatprep.subr.mxu0 0.0
        %1601 = vmatpush1.msra.mxu0 0.0
        %1602 = vmatprep.subr.mxu0 0.0
        %1603 = vmatpush1.msra.mxu0 0.0
        %1604 = vmatprep.subr.mxu0 0.0
        %1605 = vmatpush1.msra.mxu0 0.0
        %1606 = vmatprep.subr.mxu0 0.0
        %1607 = vmatpush1.msra.mxu0 0.0
        %1608 = vmatprep.mubr.f32.mxu0 0.0
        %1609 = vmatmul.mubr.f32.gmra.mrb[0].mxu0 %v1163
        %v1610 = vpop.f32.mrb[0].mxu0
        %v1611 = vadd.f32 %v830, %v1610
        %v1612 = vpop.f32.mrb[0].mxu0
        %1613 = vmatprep.mubr.f32.mxu0 0.0
        %1614 = vmatmul.mubr.f32.gmra.mrb[0].mxu0 %v1166
        %v1615 = vpop.f32.mrb[0].mxu0
        %v1616 = vadd.f32 %v835, %v1615
        %v1617 = vpop.f32.mrb[0].mxu0
        %1618 = vdwg.mxu0
        %v1619 = vxor.u32 %v1611, 2147483648
        %v1620 = vxor.u32 %v1616, 2147483648
        %v1621 = vmul.f32 %v1619, 1.442695
        %v1622 = vpow.pop %v1621
        %v1623 = vmul.f32 %v1620, 1.442695
        %v1624 = vpow.pop %v1623
        %v1625 = vadd.f32 %v1622, 1.0
        %v1626 = vadd.f32 %v1624, 1.0
        %v1627 = vrcp.pop %v1625
        %v1628 = vmul.f32 1.0, %v1627
        %v1629 = vrcp.pop %v1626
        %v1630 = vmul.f32 1.0, %v1629
        %v1631 = vmul.f32 %v546, %v1628
        %v1632 = vmul.f32 %v548, %v1630
        %v1633 = vadd.f32 %v1631, %v1632
        %s1634 = scalar_lea.vmem %s531, 8 [#allocation2]
        %1635 = vst [vmem:[%s1634] sm:$0xff] %v1633
        %s1636 = sand.u32 %s384, 1
        %s1637 = scalar_lea.sflag [#allocation3], %s1636
        %s1638 = sand.u32 %s384, 1
        %s1639 = smul.addr %s1638, 16
        %s1640 = scalar_lea.vmem [#allocation2], %s1639
        // Predicated region
        $region85: #{tpu_custom_call.1} parent=83 // pred_check
          %p1641 = pneg %p394
        $region86: #{tpu_custom_call.1} parent=83 // pred_check_branch
          %1643 = sbr.rel (%p1641) target = $region88
        $region87: #{tpu_custom_call.1} parent=83 // pred_region
          %s1644 = smul.u32 2, %s30
          %s1646 = ssub.s32 256, 256
          %1647 = vsyncadd %s1637, %s1646
          %s1648 = smul.addr %s1644, 128
          %s1649 = scalar_lea.hbm %s16, %s1648
          %s1650 = sshll.u32 %s1640, 4
          %s1651 = int_to_ptr.vmem [resolvable:$true] %s1650
          %1656 = dma.vmem_to_hbm [thread:$0]  %s1651, 256, %s1649, %s1637, 128, 128, 8
        $region88: #{tpu_custom_call.1} parent=83 // pred_fallthru
          _
      $region84: #{tpu_custom_call.1} parent=5 // pred_fallthru
        _
      %p1657 = scmp.le.s32.totalorder 2, %s25
      // Predicated region
      $region89: #{tpu_custom_call.1} parent=5 // pred_check
        %p1658 = pneg %p1657
      $region90: #{tpu_custom_call.1} parent=5 // pred_check_branch
        %1660 = sbr.rel (%p1658) target = $region92
      $region91: #{tpu_custom_call.1} parent=5 // pred_region
        %s1661 = ssub.s32 %s25, 2
        // Predicated region
        $region93: #{tpu_custom_call.1} parent=91 // pred_check
          %p1662 = pneg %p400
        $region94: #{tpu_custom_call.1} parent=91 // pred_check_branch
          %1664 = sbr.rel (%p1662) target = $region96
        $region95: #{tpu_custom_call.1} parent=91 // pred_region
          %s1665 = sand.u32 %s385, 1
          %s1666 = scalar_lea.sflag [#allocation3], %s1665
          %s1667 = sand.u32 %s385, 1
          %s1668 = smul.addr %s1667, 16
          %s1669 = scalar_lea.vmem [#allocation2], %s1668
          %1670 = dma.done %s1666, 256
        $region96: #{tpu_custom_call.1} parent=91 // pred_fallthru
          _
      $region92: #{tpu_custom_call.1} parent=5 // pred_fallthru
        _
    $region6: #{tpu_custom_call.1} parent=1 // loop_footer
      %s29 = sadd.s32 1, %s25
    $region7: #{tpu_custom_call.1} parent=1 // loop_footer_branch
      %24 = sbr.rel target = $region3
    $region8: #{tpu_custom_call.1} parent=1 // loop_exit
      _
    %1671 = vsyncpa [#allocation3], 1
    %s1672 = scalar_lea.sflag [#allocation3], 1
    %1673 = vsyncpa %s1672, 1

</llo_original>
